<compile_context>
chip_gen: v5e
topology: v5e:2x2
jax: 0.10.0
libtpu: 0.0.40
codegen_flags: <defaults>
</compile_context>

<pallas_src>
import jax
import jax.numpy as jnp
from jax.experimental import pallas as pl
from jax.experimental.pallas import tpu as pltpu


# ----------------------------------------------------------------------------
# One-time wrapper-side weight packing (call once, outside the per-step jit).
# Packed-row layout: an image row is a (W*C,) vector with lane = w*C + c.
# ----------------------------------------------------------------------------
def _band_blocks(w, width):
    """3x3 conv (cross-correlation, zero pad=1) over packed rows as three
    (W*cin, W*cout) matrices, one per dy in {-1, 0, +1}:
      out_row[r] = row[r-1] @ M[0] + row[r] @ M[1] + row[r+1] @ M[2]
    Horizontal zero padding is encoded inside each block (shifted-eye krons).
    w: (3, 3, cin, cout) indexed (dy, dx, cin, cout)."""
    cin, cout = w.shape[2], w.shape[3]
    blocks = []
    for dy in range(3):
        m = jnp.zeros((width * cin, width * cout), jnp.float32)
        for dx in range(3):
            # output column wo reads input column wi = wo + dx - 1
            shift = jnp.eye(width, k=1 - dx, dtype=jnp.float32)
            m = m + jnp.kron(shift, w[dy, dx])
        blocks.append(m)
    return jnp.stack(blocks)            # (3, W*cin, W*cout)


def _block_diag(w, width):
    """Per-pixel Linear applied to a packed row: kron(I_width, w)."""
    return jnp.kron(jnp.eye(width, dtype=jnp.float32), w)


def _row(v, width):
    """Per-channel vector tiled across a packed row: lane w*C + c -> v[c]."""
    return jnp.tile(v, width)[None, :]


def pack_params(params, width):
    """Build the band / block-diagonal / pooled forms once (hoisted out of the
    per-call forward: at realistic sizes this materializes O(depth*(W*dim)^2)
    and must not be redone every step). MXU operands are cast to bf16."""
    bf16 = jnp.bfloat16
    dim = params["embed_w"].shape[-1]
    in_ch = params["embed_w"].shape[-2]
    assert in_ch <= dim  # input channels are zero-padded up to dim
    we = jnp.pad(params["embed_w"], ((0, 0), (0, 0), (0, dim - in_ch), (0, 0)))
    blks = params["blocks"]
    return {
        "m0": _band_blocks(we, width).astype(bf16),
        "b0": _row(params["embed_b"], width),
        "m1": jnp.stack([_band_blocks(b["tm_w1"], width) for b in blks]).astype(bf16),
        "c1": jnp.stack([_row(b["tm_b1"], width) for b in blks]),
        "m2": jnp.stack([_band_blocks(b["tm_w2"], width) for b in blks]).astype(bf16),
        "c2": jnp.stack([_row(b["tm_b2"], width) for b in blks]),
        "g":  jnp.stack([_row(b["ln_g"], width) for b in blks]),
        "be": jnp.stack([_row(b["ln_b"], width) for b in blks]),
        # per-pixel mean (broadcast back to the pixel's lanes); kept f32 for
        # LayerNorm-stat precision (E[y^2]-mean^2 cancellation concern).
        "pool": jnp.kron(jnp.eye(width, dtype=jnp.float32),
                         jnp.full((dim, dim), 1.0 / dim, jnp.float32)),
        "bd1": jnp.stack([_block_diag(b["fc1_w"], width) for b in blks]).astype(bf16),
        "f1":  jnp.stack([_row(b["fc1_b"], width) for b in blks]),
        "bd2": jnp.stack([_block_diag(b["fc2_w"], width) for b in blks]).astype(bf16),
        "f2":  jnp.stack([_row(b["fc2_b"], width) for b in blks]),
    }


# ----------------------------------------------------------------------------
# Fused kernel. grid = (B, depth): one image per batch step (parallel on v7x
# megacore), one mixer block per depth step ("arbitrary"); the activation is
# resident in the output block across the depth axis (accumulator pattern).
# ----------------------------------------------------------------------------
def _mixer_kernel(x_ref, m0_ref, b0_ref,
                  m1_ref, c1_ref, m2_ref, c2_ref,
                  g_ref, be_ref, pool_ref,
                  bd1_ref, f1_ref, bd2_ref, f2_ref,
                  o_ref):
    f32, bf16 = jnp.float32, jnp.bfloat16
    d = pl.program_id(1)

    def band_conv(a, m_ref, brow_ref):
        # a: (hh, wc) f32 packed rows; m_ref: (3, wc, wc) bf16; brow: (1, wc) f32
        hh, wc = a.shape
        z = jnp.zeros((1, wc), f32)
        up = jnp.concatenate([z, a[:-1, :]], axis=0)   # up[r] = a[r-1] (top pad 0)
        dn = jnp.concatenate([a[1:, :], z], axis=0)    # dn[r] = a[r+1] (bot pad 0)
        acc = jnp.dot(up.astype(bf16), m_ref[0], preferred_element_type=f32)
        acc = acc + jnp.dot(a.astype(bf16), m_ref[1], preferred_element_type=f32)
        acc = acc + jnp.dot(dn.astype(bf16), m_ref[2], preferred_element_type=f32)
        return acc + brow_ref[...]

    # ---- patch embedding only on the first depth step of each image
    @pl.when(d == 0)
    def _():
        o_ref[...] = band_conv(x_ref[...].astype(f32),
                               m0_ref, b0_ref).astype(o_ref.dtype)

    act = o_ref[...].astype(f32)
    hh = act.shape[0]

    # ---- token mix: act + conv3x3(ReLU(conv3x3(act)))
    h = jnp.maximum(band_conv(act, m1_ref, c1_ref), 0.0)
    y = band_conv(h, m2_ref, c2_ref) + act

    # ---- channel mix: y + FC2(GELU(FC1(LayerNorm(y))))  (per pixel, packed)
    # single pooled dot over the stacked [y ; y*y] LHS -> mean and E[y^2]
    stats = jnp.dot(jnp.concatenate([y, y * y], axis=0), pool_ref[...],
                    preferred_element_type=f32)
    mean = stats[:hh]
    var = jnp.maximum(stats[hh:] - mean * mean, 0.0)   # clamp vs. cancellation
    yn = (y - mean) * jax.lax.rsqrt(var + 1e-5) * g_ref[...] + be_ref[...]
    hf = jnp.dot(yn.astype(bf16), bd1_ref[...], preferred_element_type=f32) + f1_ref[...]
    hf = jax.nn.gelu(hf, approximate=True)   # tanh form -> EUP slot (<~1e-3 vs erf)
    out = y + jnp.dot(hf.astype(bf16), bd2_ref[...], preferred_element_type=f32) + f2_ref[...]

    o_ref[...] = out.astype(o_ref.dtype)


# ----------------------------------------------------------------------------
# Public forward: NCHW in / NCHW out (PyTorch convention). `packed` comes from
# pack_params() (built once).
# ----------------------------------------------------------------------------
def mlp_mixer_forward(x_nchw, packed):
    b, in_ch, hh, ww = x_nchw.shape
    wc = packed["b0"].shape[-1]
    dim = wc // ww
    wc_ch = packed["f1"].shape[-1]
    depth = packed["m1"].shape[0]
    assert in_ch <= dim

    # ---- pack activations: NCHW -> packed rows (B, H, W*dim), lane = w*dim + c
    xh = jnp.transpose(x_nchw, (0, 2, 3, 1))                      # (B, H, W, in_ch)
    xh = jnp.pad(xh, ((0, 0), (0, 0), (0, 0), (0, dim - in_ch)))  # channel pad -> dim
    xp = xh.reshape(b, hh, wc)

    def shared(a):
        # grid-constant weight: constant block index -> fetched once, resident
        return pl.BlockSpec(a.shape, lambda bb, dd, _nd=a.ndim: (0,) * _nd)

    def per_block(tail):
        # depth-stacked weight: stream block d's slice (leading dim squeezed)
        return pl.BlockSpec((None,) + tuple(tail),
                            lambda bb, dd, _n=len(tail): (dd,) + (0,) * _n)

    out = pl.pallas_call(
        _mixer_kernel,
        out_shape=jax.ShapeDtypeStruct((b, hh, wc), x_nchw.dtype),
        grid=(b, depth),
        in_specs=[
            pl.BlockSpec((None, hh, wc), lambda bb, dd: (bb, 0, 0)),   # x
            shared(packed["m0"]), shared(packed["b0"]),
            per_block((3, wc, wc)),    # m1
            per_block((1, wc)),        # c1
            per_block((3, wc, wc)),    # m2
            per_block((1, wc)),        # c2
            per_block((1, wc)),        # ln gamma
            per_block((1, wc)),        # ln beta
            shared(packed["pool"]),
            per_block((wc, wc_ch)),    # bd1
            per_block((1, wc_ch)),     # f1
            per_block((wc_ch, wc)),    # bd2
            per_block((1, wc)),        # f2
        ],
        out_specs=pl.BlockSpec((None, hh, wc), lambda bb, dd: (bb, 0, 0)),
        compiler_params=pltpu.CompilerParams(
            dimension_semantics=("parallel", "arbitrary")),
    )(xp, packed["m0"], packed["b0"],
      packed["m1"], packed["c1"], packed["m2"], packed["c2"],
      packed["g"], packed["be"], packed["pool"],
      packed["bd1"], packed["f1"], packed["bd2"], packed["f2"])

    # ---- unpack: (B, H, W*dim) -> NCHW
    return jnp.transpose(out.reshape(b, hh, ww, dim), (0, 3, 1, 2))


# ----------------------------------------------------------------------------
# Deterministic synthetic parameters (conv weights stored as (3,3,Cin,Cout),
# linear weights as (in,out)).
# ----------------------------------------------------------------------------
def init_params(key, in_channels, dim, channel_dim, depth):
    def conv_w(k, cin, cout):
        return jax.random.normal(k, (3, 3, cin, cout), jnp.float32) * (9 * cin) ** -0.5

    def lin_w(k, cin, cout):
        return jax.random.normal(k, (cin, cout), jnp.float32) * cin ** -0.5

    keys = iter(jax.random.split(key, 2 + 6 * depth))
    params = {
        "embed_w": conv_w(next(keys), in_channels, dim),
        "embed_b": jax.random.normal(next(keys), (dim,), jnp.float32) * 0.01,
        "blocks": [],
    }
    for _ in range(depth):
        params["blocks"].append({
            "tm_w1": conv_w(next(keys), dim, dim),
            "tm_b1": jax.random.normal(next(keys), (dim,), jnp.float32) * 0.01,
            "tm_w2": conv_w(next(keys), dim, dim),
            "tm_b2": jax.random.normal(next(keys), (dim,), jnp.float32) * 0.01,
            "ln_g": jnp.ones((dim,), jnp.float32),
            "ln_b": jnp.zeros((dim,), jnp.float32),
            "fc1_w": lin_w(next(keys), dim, channel_dim),
            "fc1_b": jnp.zeros((channel_dim,), jnp.float32),
            "fc2_w": lin_w(next(keys), channel_dim, dim),
            "fc2_b": jnp.zeros((dim,), jnp.float32),
        })
    return params


if __name__ == "__main__":
    # small shapes consistent with the module's forward
    B, IN_CH, H, W = 2, 4, 16, 16
    DIM, DEPTH, CHANNEL_DIM = 8, 2, 32   # token_dim / num_patch don't affect compute

    key = jax.random.PRNGKey(0)
    kx, kp = jax.random.split(key)
    x = jax.random.normal(kx, (B, IN_CH, H, W), jnp.float32)
    params = init_params(kp, IN_CH, DIM, CHANNEL_DIM, DEPTH)

    packed = pack_params(params, W)               # one-time weight packing
    out = jax.jit(mlp_mixer_forward)(x, packed)   # recurring cost: kernel only
    out = jax.block_until_ready(out)
    assert out.shape == (B, DIM, H, W), out.shape
    assert bool(jnp.all(jnp.isfinite(out)))
    print("KERNEL_OK")
</pallas_src>

<mosaic_0001>
module attributes {stable_mosaic.version = 11 : i64} {
  func.func @_mixer_kernel(%arg0: i32, %arg1: i32, %arg2: memref<1x16x128xf32, #tpu.memory_space<vmem>>, %arg3: memref<3x128x128xbf16, #tpu.memory_space<vmem>>, %arg4: memref<1x128xf32, #tpu.memory_space<vmem>>, %arg5: memref<1x3x128x128xbf16, #tpu.memory_space<vmem>>, %arg6: memref<1x1x128xf32, #tpu.memory_space<vmem>>, %arg7: memref<1x3x128x128xbf16, #tpu.memory_space<vmem>>, %arg8: memref<1x1x128xf32, #tpu.memory_space<vmem>>, %arg9: memref<1x1x128xf32, #tpu.memory_space<vmem>>, %arg10: memref<1x1x128xf32, #tpu.memory_space<vmem>>, %arg11: memref<128x128xf32, #tpu.memory_space<vmem>>, %arg12: memref<1x128x512xbf16, #tpu.memory_space<vmem>>, %arg13: memref<1x1x512xf32, #tpu.memory_space<vmem>>, %arg14: memref<1x512x128xbf16, #tpu.memory_space<vmem>>, %arg15: memref<1x1x128xf32, #tpu.memory_space<vmem>>, %arg16: memref<1x16x128xf32, #tpu.memory_space<vmem>>) attributes {dimension_semantics = [#tpu.dimension_semantics<parallel>, #tpu.dimension_semantics<arbitrary>], iteration_bounds = array<i64: 2, 2>, scalar_prefetch = 0 : i64, scratch_operands = 0 : i64, tpu.core_type = #tpu.core_type<tc>, window_params = [{transform_indices = @transform_0, window_bounds = array<i64: 1, 16, 128>}, {pipeline_mode = #tpu.pipeline_mode<synchronous>, transform_indices = @transform_1, window_bounds = array<i64: 3, 128, 128>}, {pipeline_mode = #tpu.pipeline_mode<synchronous>, transform_indices = @transform_2, window_bounds = array<i64: 1, 128>}, {transform_indices = @transform_3, window_bounds = array<i64: 1, 3, 128, 128>}, {transform_indices = @transform_4, window_bounds = array<i64: 1, 1, 128>}, {transform_indices = @transform_5, window_bounds = array<i64: 1, 3, 128, 128>}, {transform_indices = @transform_6, window_bounds = array<i64: 1, 1, 128>}, {transform_indices = @transform_7, window_bounds = array<i64: 1, 1, 128>}, {transform_indices = @transform_8, window_bounds = array<i64: 1, 1, 128>}, {pipeline_mode = #tpu.pipeline_mode<synchronous>, transform_indices = @transform_9, window_bounds = array<i64: 128, 128>}, {transform_indices = @transform_10, window_bounds = array<i64: 1, 128, 512>}, {transform_indices = @transform_11, window_bounds = array<i64: 1, 1, 512>}, {transform_indices = @transform_12, window_bounds = array<i64: 1, 512, 128>}, {transform_indices = @transform_13, window_bounds = array<i64: 1, 1, 128>}, {transform_indices = @transform_14, window_bounds = array<i64: 1, 16, 128>}]} {
    %c0_i32 = arith.constant 0 : i32
    %0 = arith.cmpi eq, %arg1, %c0_i32 : i32
    %1 = arith.extui %0 : i1 to i32
    %c0_i32_0 = arith.constant 0 : i32
    %2 = arith.cmpi ne, %1, %c0_i32_0 : i32
    scf.if %2 {
      %c0_71 = arith.constant 0 : index
      %c0_72 = arith.constant 0 : index
      %c0_73 = arith.constant 0 : index
      %110 = vector.load %arg2[%c0_71, %c0_72, %c0_73] : memref<1x16x128xf32, #tpu.memory_space<vmem>>, vector<1x16x128xf32>
      %111 = vector.shape_cast %110 : vector<1x16x128xf32> to vector<16x128xf32>
      %cst_74 = arith.constant 0.000000e+00 : f32
      %112 = vector.broadcast %cst_74 : f32 to vector<1x128xf32>
      %113 = vector.extract_strided_slice %111 {offsets = [0, 0], sizes = [15, 128], strides = [1, 1]} : vector<16x128xf32> to vector<15x128xf32>
      %114 = tpu.concatenate %112, %113 in 0 : vector<1x128xf32>, vector<15x128xf32> -> vector<16x128xf32>
      %115 = vector.extract_strided_slice %111 {offsets = [1, 0], sizes = [15, 128], strides = [1, 1]} : vector<16x128xf32> to vector<15x128xf32>
      %116 = tpu.concatenate %115, %112 in 0 : vector<15x128xf32>, vector<1x128xf32> -> vector<16x128xf32>
      %117 = arith.truncf %114 : vector<16x128xf32> to vector<16x128xbf16>
      %c0_75 = arith.constant 0 : index
      %c0_76 = arith.constant 0 : index
      %c0_77 = arith.constant 0 : index
      %118 = vector.load %arg3[%c0_75, %c0_76, %c0_77] : memref<3x128x128xbf16, #tpu.memory_space<vmem>>, vector<1x128x128xbf16>
      %119 = vector.shape_cast %118 : vector<1x128x128xbf16> to vector<128x128xbf16>
      %cst_78 = arith.constant dense<0.000000e+00> : vector<16x128xf32>
      %120 = tpu.matmul %117, %119, %cst_78 {dimension_numbers = #tpu.dot_dimension_numbers<[1], [0], [0], [1], [0, 0, 1, 1], [], []>} : vector<16x128xbf16>, vector<128x128xbf16>, vector<16x128xf32> -> vector<16x128xf32>
      %121 = arith.truncf %111 : vector<16x128xf32> to vector<16x128xbf16>
      %c1_79 = arith.constant 1 : index
      %c0_80 = arith.constant 0 : index
      %c0_81 = arith.constant 0 : index
      %122 = vector.load %arg3[%c1_79, %c0_80, %c0_81] : memref<3x128x128xbf16, #tpu.memory_space<vmem>>, vector<1x128x128xbf16>
      %123 = vector.shape_cast %122 : vector<1x128x128xbf16> to vector<128x128xbf16>
      %cst_82 = arith.constant dense<0.000000e+00> : vector<16x128xf32>
      %124 = tpu.matmul %121, %123, %cst_82 {dimension_numbers = #tpu.dot_dimension_numbers<[1], [0], [0], [1], [0, 0, 1, 1], [], []>} : vector<16x128xbf16>, vector<128x128xbf16>, vector<16x128xf32> -> vector<16x128xf32>
      %125 = arith.addf %120, %124 : vector<16x128xf32>
      %126 = arith.truncf %116 : vector<16x128xf32> to vector<16x128xbf16>
      %c2_83 = arith.constant 2 : index
      %c0_84 = arith.constant 0 : index
      %c0_85 = arith.constant 0 : index
      %127 = vector.load %arg3[%c2_83, %c0_84, %c0_85] : memref<3x128x128xbf16, #tpu.memory_space<vmem>>, vector<1x128x128xbf16>
      %128 = vector.shape_cast %127 : vector<1x128x128xbf16> to vector<128x128xbf16>
      %cst_86 = arith.constant dense<0.000000e+00> : vector<16x128xf32>
      %129 = tpu.matmul %126, %128, %cst_86 {dimension_numbers = #tpu.dot_dimension_numbers<[1], [0], [0], [1], [0, 0, 1, 1], [], []>} : vector<16x128xbf16>, vector<128x128xbf16>, vector<16x128xf32> -> vector<16x128xf32>
      %130 = arith.addf %125, %129 : vector<16x128xf32>
      %c0_87 = arith.constant 0 : index
      %c0_88 = arith.constant 0 : index
      %131 = vector.load %arg4[%c0_87, %c0_88] : memref<1x128xf32, #tpu.memory_space<vmem>>, vector<1x128xf32>
      %132 = vector.broadcast %131 : vector<1x128xf32> to vector<16x128xf32>
      %133 = arith.addf %130, %132 : vector<16x128xf32>
      %c0_89 = arith.constant 0 : index
      %c0_90 = arith.constant 0 : index
      %c0_91 = arith.constant 0 : index
      %134 = vector.load %arg16[%c0_89, %c0_90, %c0_91] : memref<1x16x128xf32, #tpu.memory_space<vmem>>, vector<1x16x128xf32>
      %135 = vector.shape_cast %134 : vector<1x16x128xf32> to vector<16x128xf32>
      %136 = vector.shape_cast %133 : vector<16x128xf32> to vector<1x16x128xf32>
      tpu.vector_store %arg16[%c0_89, %c0_90, %c0_91], %136 {strides = array<i32>} : memref<1x16x128xf32, #tpu.memory_space<vmem>>, vector<1x16x128xf32>,
    } else {
    }
    %c0 = arith.constant 0 : index
    %c0_1 = arith.constant 0 : index
    %c0_2 = arith.constant 0 : index
    %3 = vector.load %arg16[%c0, %c0_1, %c0_2] : memref<1x16x128xf32, #tpu.memory_space<vmem>>, vector<1x16x128xf32>
    %4 = vector.shape_cast %3 : vector<1x16x128xf32> to vector<16x128xf32>
    %cst = arith.constant 0.000000e+00 : f32
    %5 = vector.broadcast %cst : f32 to vector<1x128xf32>
    %6 = vector.extract_strided_slice %4 {offsets = [0, 0], sizes = [15, 128], strides = [1, 1]} : vector<16x128xf32> to vector<15x128xf32>
    %7 = tpu.concatenate %5, %6 in 0 : vector<1x128xf32>, vector<15x128xf32> -> vector<16x128xf32>
    %8 = vector.extract_strided_slice %4 {offsets = [1, 0], sizes = [15, 128], strides = [1, 1]} : vector<16x128xf32> to vector<15x128xf32>
    %9 = tpu.concatenate %8, %5 in 0 : vector<15x128xf32>, vector<1x128xf32> -> vector<16x128xf32>
    %10 = arith.truncf %7 : vector<16x128xf32> to vector<16x128xbf16>
    %c0_3 = arith.constant 0 : index
    %c0_4 = arith.constant 0 : index
    %c0_5 = arith.constant 0 : index
    %c0_6 = arith.constant 0 : index
    %11 = vector.load %arg5[%c0_3, %c0_4, %c0_5, %c0_6] : memref<1x3x128x128xbf16, #tpu.memory_space<vmem>>, vector<1x1x128x128xbf16>
    %12 = vector.shape_cast %11 : vector<1x1x128x128xbf16> to vector<128x128xbf16>
    %cst_7 = arith.constant dense<0.000000e+00> : vector<16x128xf32>
    %13 = tpu.matmul %10, %12, %cst_7 {dimension_numbers = #tpu.dot_dimension_numbers<[1], [0], [0], [1], [0, 0, 1, 1], [], []>} : vector<16x128xbf16>, vector<128x128xbf16>, vector<16x128xf32> -> vector<16x128xf32>
    %14 = arith.truncf %4 : vector<16x128xf32> to vector<16x128xbf16>
    %c0_8 = arith.constant 0 : index
    %c1 = arith.constant 1 : index
    %c0_9 = arith.constant 0 : index
    %c0_10 = arith.constant 0 : index
    %15 = vector.load %arg5[%c0_8, %c1, %c0_9, %c0_10] : memref<1x3x128x128xbf16, #tpu.memory_space<vmem>>, vector<1x1x128x128xbf16>
    %16 = vector.shape_cast %15 : vector<1x1x128x128xbf16> to vector<128x128xbf16>
    %cst_11 = arith.constant dense<0.000000e+00> : vector<16x128xf32>
    %17 = tpu.matmul %14, %16, %cst_11 {dimension_numbers = #tpu.dot_dimension_numbers<[1], [0], [0], [1], [0, 0, 1, 1], [], []>} : vector<16x128xbf16>, vector<128x128xbf16>, vector<16x128xf32> -> vector<16x128xf32>
    %18 = arith.addf %13, %17 : vector<16x128xf32>
    %19 = arith.truncf %9 : vector<16x128xf32> to vector<16x128xbf16>
    %c0_12 = arith.constant 0 : index
    %c2 = arith.constant 2 : index
    %c0_13 = arith.constant 0 : index
    %c0_14 = arith.constant 0 : index
    %20 = vector.load %arg5[%c0_12, %c2, %c0_13, %c0_14] : memref<1x3x128x128xbf16, #tpu.memory_space<vmem>>, vector<1x1x128x128xbf16>
    %21 = vector.shape_cast %20 : vector<1x1x128x128xbf16> to vector<128x128xbf16>
    %cst_15 = arith.constant dense<0.000000e+00> : vector<16x128xf32>
    %22 = tpu.matmul %19, %21, %cst_15 {dimension_numbers = #tpu.dot_dimension_numbers<[1], [0], [0], [1], [0, 0, 1, 1], [], []>} : vector<16x128xbf16>, vector<128x128xbf16>, vector<16x128xf32> -> vector<16x128xf32>
    %23 = arith.addf %18, %22 : vector<16x128xf32>
    %c0_16 = arith.constant 0 : index
    %c0_17 = arith.constant 0 : index
    %c0_18 = arith.constant 0 : index
    %24 = vector.load %arg6[%c0_16, %c0_17, %c0_18] : memref<1x1x128xf32, #tpu.memory_space<vmem>>, vector<1x1x128xf32>
    %25 = vector.shape_cast %24 : vector<1x1x128xf32> to vector<1x128xf32>
    %26 = vector.broadcast %25 : vector<1x128xf32> to vector<16x128xf32>
    %27 = arith.addf %23, %26 : vector<16x128xf32>
    %cst_19 = arith.constant 0.000000e+00 : f32
    %28 = vector.broadcast %cst_19 : f32 to vector<16x128xf32>
    %29 = arith.maximumf %27, %28 : vector<16x128xf32>
    %cst_20 = arith.constant 0.000000e+00 : f32
    %30 = vector.broadcast %cst_20 : f32 to vector<1x128xf32>
    %31 = vector.extract_strided_slice %29 {offsets = [0, 0], sizes = [15, 128], strides = [1, 1]} : vector<16x128xf32> to vector<15x128xf32>
    %32 = tpu.concatenate %30, %31 in 0 : vector<1x128xf32>, vector<15x128xf32> -> vector<16x128xf32>
    %33 = vector.extract_strided_slice %29 {offsets = [1, 0], sizes = [15, 128], strides = [1, 1]} : vector<16x128xf32> to vector<15x128xf32>
    %34 = tpu.concatenate %33, %30 in 0 : vector<15x128xf32>, vector<1x128xf32> -> vector<16x128xf32>
    %35 = arith.truncf %32 : vector<16x128xf32> to vector<16x128xbf16>
    %c0_21 = arith.constant 0 : index
    %c0_22 = arith.constant 0 : index
    %c0_23 = arith.constant 0 : index
    %c0_24 = arith.constant 0 : index
    %36 = vector.load %arg7[%c0_21, %c0_22, %c0_23, %c0_24] : memref<1x3x128x128xbf16, #tpu.memory_space<vmem>>, vector<1x1x128x128xbf16>
    %37 = vector.shape_cast %36 : vector<1x1x128x128xbf16> to vector<128x128xbf16>
    %cst_25 = arith.constant dense<0.000000e+00> : vector<16x128xf32>
    %38 = tpu.matmul %35, %37, %cst_25 {dimension_numbers = #tpu.dot_dimension_numbers<[1], [0], [0], [1], [0, 0, 1, 1], [], []>} : vector<16x128xbf16>, vector<128x128xbf16>, vector<16x128xf32> -> vector<16x128xf32>
    %39 = arith.truncf %29 : vector<16x128xf32> to vector<16x128xbf16>
    %c0_26 = arith.constant 0 : index
    %c1_27 = arith.constant 1 : index
    %c0_28 = arith.constant 0 : index
    %c0_29 = arith.constant 0 : index
    %40 = vector.load %arg7[%c0_26, %c1_27, %c0_28, %c0_29] : memref<1x3x128x128xbf16, #tpu.memory_space<vmem>>, vector<1x1x128x128xbf16>
    %41 = vector.shape_cast %40 : vector<1x1x128x128xbf16> to vector<128x128xbf16>
    %cst_30 = arith.constant dense<0.000000e+00> : vector<16x128xf32>
    %42 = tpu.matmul %39, %41, %cst_30 {dimension_numbers = #tpu.dot_dimension_numbers<[1], [0], [0], [1], [0, 0, 1, 1], [], []>} : vector<16x128xbf16>, vector<128x128xbf16>, vector<16x128xf32> -> vector<16x128xf32>
    %43 = arith.addf %38, %42 : vector<16x128xf32>
    %44 = arith.truncf %34 : vector<16x128xf32> to vector<16x128xbf16>
    %c0_31 = arith.constant 0 : index
    %c2_32 = arith.constant 2 : index
    %c0_33 = arith.constant 0 : index
    %c0_34 = arith.constant 0 : index
    %45 = vector.load %arg7[%c0_31, %c2_32, %c0_33, %c0_34] : memref<1x3x128x128xbf16, #tpu.memory_space<vmem>>, vector<1x1x128x128xbf16>
    %46 = vector.shape_cast %45 : vector<1x1x128x128xbf16> to vector<128x128xbf16>
    %cst_35 = arith.constant dense<0.000000e+00> : vector<16x128xf32>
    %47 = tpu.matmul %44, %46, %cst_35 {dimension_numbers = #tpu.dot_dimension_numbers<[1], [0], [0], [1], [0, 0, 1, 1], [], []>} : vector<16x128xbf16>, vector<128x128xbf16>, vector<16x128xf32> -> vector<16x128xf32>
    %48 = arith.addf %43, %47 : vector<16x128xf32>
    %c0_36 = arith.constant 0 : index
    %c0_37 = arith.constant 0 : index
    %c0_38 = arith.constant 0 : index
    %49 = vector.load %arg8[%c0_36, %c0_37, %c0_38] : memref<1x1x128xf32, #tpu.memory_space<vmem>>, vector<1x1x128xf32>
    %50 = vector.shape_cast %49 : vector<1x1x128xf32> to vector<1x128xf32>
    %51 = vector.broadcast %50 : vector<1x128xf32> to vector<16x128xf32>
    %52 = arith.addf %48, %51 : vector<16x128xf32>
    %53 = arith.addf %52, %4 : vector<16x128xf32>
    %54 = arith.mulf %53, %53 : vector<16x128xf32>
    %55 = tpu.concatenate %53, %54 in 0 : vector<16x128xf32>, vector<16x128xf32> -> vector<32x128xf32>
    %c0_39 = arith.constant 0 : index
    %c0_40 = arith.constant 0 : index
    %56 = vector.load %arg11[%c0_39, %c0_40] : memref<128x128xf32, #tpu.memory_space<vmem>>, vector<128x128xf32>
    %cst_41 = arith.constant dense<0.000000e+00> : vector<32x128xf32>
    %57 = tpu.matmul %55, %56, %cst_41 {dimension_numbers = #tpu.dot_dimension_numbers<[1], [0], [0], [1], [0, 0, 1, 1], [], []>} : vector<32x128xf32>, vector<128x128xf32>, vector<32x128xf32> -> vector<32x128xf32>
    %58 = vector.extract_strided_slice %57 {offsets = [0, 0], sizes = [16, 128], strides = [1, 1]} : vector<32x128xf32> to vector<16x128xf32>
    %59 = vector.extract_strided_slice %57 {offsets = [16, 0], sizes = [16, 128], strides = [1, 1]} : vector<32x128xf32> to vector<16x128xf32>
    %60 = arith.mulf %58, %58 : vector<16x128xf32>
    %61 = arith.subf %59, %60 : vector<16x128xf32>
    %cst_42 = arith.constant 0.000000e+00 : f32
    %62 = vector.broadcast %cst_42 : f32 to vector<16x128xf32>
    %63 = arith.maximumf %61, %62 : vector<16x128xf32>
    %64 = arith.subf %53, %58 : vector<16x128xf32>
    %cst_43 = arith.constant 9.99999974E-6 : f32
    %65 = vector.broadcast %cst_43 : f32 to vector<16x128xf32>
    %66 = arith.addf %63, %65 : vector<16x128xf32>
    %67 = math.rsqrt %66 : vector<16x128xf32>
    %68 = arith.mulf %64, %67 : vector<16x128xf32>
    %c0_44 = arith.constant 0 : index
    %c0_45 = arith.constant 0 : index
    %c0_46 = arith.constant 0 : index
    %69 = vector.load %arg9[%c0_44, %c0_45, %c0_46] : memref<1x1x128xf32, #tpu.memory_space<vmem>>, vector<1x1x128xf32>
    %70 = vector.shape_cast %69 : vector<1x1x128xf32> to vector<1x128xf32>
    %71 = vector.broadcast %70 : vector<1x128xf32> to vector<16x128xf32>
    %72 = arith.mulf %68, %71 : vector<16x128xf32>
    %c0_47 = arith.constant 0 : index
    %c0_48 = arith.constant 0 : index
    %c0_49 = arith.constant 0 : index
    %73 = vector.load %arg10[%c0_47, %c0_48, %c0_49] : memref<1x1x128xf32, #tpu.memory_space<vmem>>, vector<1x1x128xf32>
    %74 = vector.shape_cast %73 : vector<1x1x128xf32> to vector<1x128xf32>
    %75 = vector.broadcast %74 : vector<1x128xf32> to vector<16x128xf32>
    %76 = arith.addf %72, %75 : vector<16x128xf32>
    %77 = arith.truncf %76 : vector<16x128xf32> to vector<16x128xbf16>
    %c0_50 = arith.constant 0 : index
    %c0_51 = arith.constant 0 : index
    %c0_52 = arith.constant 0 : index
    %78 = vector.load %arg12[%c0_50, %c0_51, %c0_52] : memref<1x128x512xbf16, #tpu.memory_space<vmem>>, vector<1x128x512xbf16>
    %79 = vector.shape_cast %78 : vector<1x128x512xbf16> to vector<128x512xbf16>
    %cst_53 = arith.constant dense<0.000000e+00> : vector<16x512xf32>
    %80 = tpu.matmul %77, %79, %cst_53 {dimension_numbers = #tpu.dot_dimension_numbers<[1], [0], [0], [1], [0, 0, 1, 1], [], []>} : vector<16x128xbf16>, vector<128x512xbf16>, vector<16x512xf32> -> vector<16x512xf32>
    %c0_54 = arith.constant 0 : index
    %c0_55 = arith.constant 0 : index
    %c0_56 = arith.constant 0 : index
    %81 = vector.load %arg13[%c0_54, %c0_55, %c0_56] : memref<1x1x512xf32, #tpu.memory_space<vmem>>, vector<1x1x512xf32>
    %82 = vector.shape_cast %81 : vector<1x1x512xf32> to vector<1x512xf32>
    %83 = vector.broadcast %82 : vector<1x512xf32> to vector<16x512xf32>
    %84 = arith.addf %80, %83 : vector<16x512xf32>
    %85 = arith.mulf %84, %84 : vector<16x512xf32>
    %86 = arith.mulf %84, %85 : vector<16x512xf32>
    %cst_57 = arith.constant 4.471500e-02 : f32
    %87 = vector.broadcast %cst_57 : f32 to vector<16x512xf32>
    %88 = arith.mulf %87, %86 : vector<16x512xf32>
    %89 = arith.addf %84, %88 : vector<16x512xf32>
    %cst_58 = arith.constant 0.797884583 : f32
    %90 = vector.broadcast %cst_58 : f32 to vector<16x512xf32>
    %91 = arith.mulf %90, %89 : vector<16x512xf32>
    %92 = math.tanh %91 : vector<16x512xf32>
    %cst_59 = arith.constant 1.000000e+00 : f32
    %93 = vector.broadcast %cst_59 : f32 to vector<16x512xf32>
    %94 = arith.addf %93, %92 : vector<16x512xf32>
    %cst_60 = arith.constant 5.000000e-01 : f32
    %95 = vector.broadcast %cst_60 : f32 to vector<16x512xf32>
    %96 = arith.mulf %95, %94 : vector<16x512xf32>
    %97 = arith.mulf %84, %96 : vector<16x512xf32>
    %98 = arith.truncf %97 : vector<16x512xf32> to vector<16x512xbf16>
    %c0_61 = arith.constant 0 : index
    %c0_62 = arith.constant 0 : index
    %c0_63 = arith.constant 0 : index
    %99 = vector.load %arg14[%c0_61, %c0_62, %c0_63] : memref<1x512x128xbf16, #tpu.memory_space<vmem>>, vector<1x512x128xbf16>
    %100 = vector.shape_cast %99 : vector<1x512x128xbf16> to vector<512x128xbf16>
    %cst_64 = arith.constant dense<0.000000e+00> : vector<16x128xf32>
    %101 = tpu.matmul %98, %100, %cst_64 {dimension_numbers = #tpu.dot_dimension_numbers<[1], [0], [0], [1], [0, 0, 1, 1], [], []>} : vector<16x512xbf16>, vector<512x128xbf16>, vector<16x128xf32> -> vector<16x128xf32>
    %102 = arith.addf %53, %101 : vector<16x128xf32>
    %c0_65 = arith.constant 0 : index
    %c0_66 = arith.constant 0 : index
    %c0_67 = arith.constant 0 : index
    %103 = vector.load %arg15[%c0_65, %c0_66, %c0_67] : memref<1x1x128xf32, #tpu.memory_space<vmem>>, vector<1x1x128xf32>
    %104 = vector.shape_cast %103 : vector<1x1x128xf32> to vector<1x128xf32>
    %105 = vector.broadcast %104 : vector<1x128xf32> to vector<16x128xf32>
    %106 = arith.addf %102, %105 : vector<16x128xf32>
    %c0_68 = arith.constant 0 : index
    %c0_69 = arith.constant 0 : index
    %c0_70 = arith.constant 0 : index
    %107 = vector.load %arg16[%c0_68, %c0_69, %c0_70] : memref<1x16x128xf32, #tpu.memory_space<vmem>>, vector<1x16x128xf32>
    %108 = vector.shape_cast %107 : vector<1x16x128xf32> to vector<16x128xf32>
    %109 = vector.shape_cast %106 : vector<16x128xf32> to vector<1x16x128xf32>
    tpu.vector_store %arg16[%c0_68, %c0_69, %c0_70], %109 {strides = array<i32>} : memref<1x16x128xf32, #tpu.memory_space<vmem>>, vector<1x16x128xf32>,
    return
  }
  func.func @transform_0(%arg0: i32, %arg1: i32) -> (i32, i32, i32) {
    %c0_i32 = arith.constant 0 : i32
    %c0_i32_0 = arith.constant 0 : i32
    %c0_i32_1 = arith.constant 0 : i32
    return %arg0, %c0_i32, %c0_i32_0 : i32, i32, i32
  }
  func.func @transform_1(%arg0: i32, %arg1: i32) -> (i32, i32, i32) {
    %c0_i32 = arith.constant 0 : i32
    %c0_i32_0 = arith.constant 0 : i32
    %c0_i32_1 = arith.constant 0 : i32
    %c0_i32_2 = arith.constant 0 : i32
    return %c0_i32, %c0_i32_0, %c0_i32_1 : i32, i32, i32
  }
  func.func @transform_2(%arg0: i32, %arg1: i32) -> (i32, i32) {
    %c0_i32 = arith.constant 0 : i32
    %c0_i32_0 = arith.constant 0 : i32
    %c0_i32_1 = arith.constant 0 : i32
    return %c0_i32, %c0_i32_0 : i32, i32
  }
  func.func @transform_3(%arg0: i32, %arg1: i32) -> (i32, i32, i32, i32) {
    %c0_i32 = arith.constant 0 : i32
    %c0_i32_0 = arith.constant 0 : i32
    %c0_i32_1 = arith.constant 0 : i32
    %c0_i32_2 = arith.constant 0 : i32
    return %arg1, %c0_i32, %c0_i32_0, %c0_i32_1 : i32, i32, i32, i32
  }
  func.func @transform_4(%arg0: i32, %arg1: i32) -> (i32, i32, i32) {
    %c0_i32 = arith.constant 0 : i32
    %c0_i32_0 = arith.constant 0 : i32
    %c0_i32_1 = arith.constant 0 : i32
    return %arg1, %c0_i32, %c0_i32_0 : i32, i32, i32
  }
  func.func @transform_5(%arg0: i32, %arg1: i32) -> (i32, i32, i32, i32) {
    %c0_i32 = arith.constant 0 : i32
    %c0_i32_0 = arith.constant 0 : i32
    %c0_i32_1 = arith.constant 0 : i32
    %c0_i32_2 = arith.constant 0 : i32
    return %arg1, %c0_i32, %c0_i32_0, %c0_i32_1 : i32, i32, i32, i32
  }
  func.func @transform_6(%arg0: i32, %arg1: i32) -> (i32, i32, i32) {
    %c0_i32 = arith.constant 0 : i32
    %c0_i32_0 = arith.constant 0 : i32
    %c0_i32_1 = arith.constant 0 : i32
    return %arg1, %c0_i32, %c0_i32_0 : i32, i32, i32
  }
  func.func @transform_7(%arg0: i32, %arg1: i32) -> (i32, i32, i32) {
    %c0_i32 = arith.constant 0 : i32
    %c0_i32_0 = arith.constant 0 : i32
    %c0_i32_1 = arith.constant 0 : i32
    return %arg1, %c0_i32, %c0_i32_0 : i32, i32, i32
  }
  func.func @transform_8(%arg0: i32, %arg1: i32) -> (i32, i32, i32) {
    %c0_i32 = arith.constant 0 : i32
    %c0_i32_0 = arith.constant 0 : i32
    %c0_i32_1 = arith.constant 0 : i32
    return %arg1, %c0_i32, %c0_i32_0 : i32, i32, i32
  }
  func.func @transform_9(%arg0: i32, %arg1: i32) -> (i32, i32) {
    %c0_i32 = arith.constant 0 : i32
    %c0_i32_0 = arith.constant 0 : i32
    %c0_i32_1 = arith.constant 0 : i32
    return %c0_i32, %c0_i32_0 : i32, i32
  }
  func.func @transform_10(%arg0: i32, %arg1: i32) -> (i32, i32, i32) {
    %c0_i32 = arith.constant 0 : i32
    %c0_i32_0 = arith.constant 0 : i32
    %c0_i32_1 = arith.constant 0 : i32
    return %arg1, %c0_i32, %c0_i32_0 : i32, i32, i32
  }
  func.func @transform_11(%arg0: i32, %arg1: i32) -> (i32, i32, i32) {
    %c0_i32 = arith.constant 0 : i32
    %c0_i32_0 = arith.constant 0 : i32
    %c0_i32_1 = arith.constant 0 : i32
    return %arg1, %c0_i32, %c0_i32_0 : i32, i32, i32
  }
  func.func @transform_12(%arg0: i32, %arg1: i32) -> (i32, i32, i32) {
    %c0_i32 = arith.constant 0 : i32
    %c0_i32_0 = arith.constant 0 : i32
    %c0_i32_1 = arith.constant 0 : i32
    return %arg1, %c0_i32, %c0_i32_0 : i32, i32, i32
  }
  func.func @transform_13(%arg0: i32, %arg1: i32) -> (i32, i32, i32) {
    %c0_i32 = arith.constant 0 : i32
    %c0_i32_0 = arith.constant 0 : i32
    %c0_i32_1 = arith.constant 0 : i32
    return %arg1, %c0_i32, %c0_i32_0 : i32, i32, i32
  }
  func.func @transform_14(%arg0: i32, %arg1: i32) -> (i32, i32, i32) {
    %c0_i32 = arith.constant 0 : i32
    %c0_i32_0 = arith.constant 0 : i32
    %c0_i32_1 = arith.constant 0 : i32
    return %arg0, %c0_i32, %c0_i32_0 : i32, i32, i32
  }
}

</mosaic_0001>

<llo_original>
// kernel: mlp_mixer_forward.1
$region0: #{mlp_mixer_forward.1}
  #allocation0 [shape = 'u32[]', space=smem, size = 0x4, offset = 0x4, fixed_abs, tag = 'smem constant byte address 0x4 - core index']
  #allocation1 [shape = 'u32[72,128]{1,0:T(1,128)}', space=vmem, size = 0x9000, scoped, tag = 'internal scratch']
  %s0 = inlined_call_operand.vmem [shape: f32[2,16,128], index: 0, kind: input, shape index: {}]
  %s1 = inlined_call_operand.hbm [shape: bf16[3,128,128], index: 1, kind: input, shape index: {}]
  %s2 = inlined_call_operand.vmem [shape: f32[1,128], index: 2, kind: input, shape index: {}]
  %s3 = inlined_call_operand.vmem [shape: bf16[2,3,128,128], index: 3, kind: input, shape index: {}]
  %s4 = inlined_call_operand.vmem [shape: f32[2,1,128], index: 4, kind: input, shape index: {}]
  %s5 = inlined_call_operand.hbm [shape: bf16[2,3,128,128], index: 5, kind: input, shape index: {}]
  %s6 = inlined_call_operand.vmem [shape: f32[2,1,128], index: 6, kind: input, shape index: {}]
  %s7 = inlined_call_operand.vmem [shape: f32[2,1,128], index: 7, kind: input, shape index: {}]
  %s8 = inlined_call_operand.vmem [shape: f32[2,1,128], index: 8, kind: input, shape index: {}]
  %s9 = inlined_call_operand.hbm [shape: f32[128,128], index: 9, kind: input, shape index: {}]
  %s10 = inlined_call_operand.vmem [shape: bf16[2,128,512], index: 10, kind: input, shape index: {}]
  %s11 = inlined_call_operand.vmem [shape: f32[2,1,512], index: 11, kind: input, shape index: {}]
  %s12 = inlined_call_operand.hbm [shape: bf16[2,512,128], index: 12, kind: input, shape index: {}]
  %s13 = inlined_call_operand.vmem [shape: f32[2,1,128], index: 13, kind: input, shape index: {}]
  %s14 = inlined_call_operand.vmem [shape: f32[2,16,128], index: 14, kind: output, shape index: {}]
  %s15 = sld [smem:[#allocation0]]
  $region109: #{mlp_mixer_forward.1} parent=0
    _
  %s17 = ssub.s32 1, %s15
  %s18 = scalar_select 0, %s17, %s15
  $region1: #{mlp_mixer_forward.1} parent=0
    #allocation2 [shape = 'u8[98304]{0}', space=vmem, size = 0x18000, scoped, tag = 'input window, operand 1, single buffered']
    #allocation3 [shape = 's32[2]{0}', space=sflag, size = 0x8, scoped, tag = 'scoped memory for mlp_mixer_forward.1']
    #allocation4 [shape = 'u8[196608]{0}', space=vmem, size = 0x30000, scoped, tag = 'input window, operand 5']
    #allocation5 [shape = 's32[2]{0}', space=sflag, size = 0x8, scoped, tag = 'scoped memory for mlp_mixer_forward.1']
    #allocation6 [shape = 'u8[65536]{0}', space=vmem, size = 0x10000, scoped, tag = 'input window, operand 9, single buffered']
    #allocation7 [shape = 'u8[262144]{0}', space=vmem, size = 0x40000, scoped, tag = 'input window, operand 12']
    #allocation8 [shape = 's32[2]{0}', space=sflag, size = 0x8, scoped, tag = 'scoped memory for mlp_mixer_forward.1']
    %19 = vsyncpa [#allocation3], 0
    %20 = vsyncpa [#allocation5], 0
    %s21 = scalar_lea.sflag [#allocation5], 1
    %22 = vsyncpa %s21, 0
    %23 = vsyncpa [#allocation8], 0
    %s24 = scalar_lea.sflag [#allocation8], 1
    %25 = vsyncpa %s24, 0
    loop: start=0, step=1, limit=6
    $region2: #{mlp_mixer_forward.1} parent=1 // loop_pre_header
      _
    $region3: #{mlp_mixer_forward.1} parent=1 // loop_header
      %s27 = sphi 0, %s31
      %p28 = scmp.ge.s32.totalorder %s27, 6
      %s34 = sphi 0, %s46
      %s35 = sphi 0, %s42
      %s36 = sphi 0, %s34
      %s37 = sphi 0, %s35
      %s38 = sphi 0, %s36
      %s39 = sphi 0, %s37
      %s49 = sphi 0, %s51
      %s52 = sphi 0, %s49
      %s53 = sphi 0, %s52
      %s69 = sphi 0, %s53
      %s73 = sphi 0, %s73
      %s75 = sphi 0, %s73
      %s76 = sphi 0, %s75
      %s90 = sphi 0, %s76
      %s94 = sphi 0, %s94
      %s96 = sphi 0, %s94
      %s97 = sphi 0, %s96
      %s111 = sphi 0, %s97
      %s117 = sphi 0, %s119
      %s120 = sphi 0, %s117
      %s121 = sphi 0, %s120
      %s137 = sphi 0, %s121
      %s143 = sphi 0, %s145
      %s146 = sphi 0, %s143
      %s147 = sphi 0, %s146
      %s163 = sphi 0, %s147
      %s169 = sphi 0, %s171
      %s172 = sphi 0, %s169
      %s173 = sphi 0, %s172
      %s189 = sphi 0, %s173
      %s195 = sphi 0, %s197
      %s198 = sphi 0, %s195
      %s199 = sphi 0, %s198
      %s215 = sphi 0, %s199
      %s221 = sphi 0, %s223
      %s224 = sphi 0, %s221
      %s225 = sphi 0, %s224
      %s241 = sphi 0, %s225
      %s247 = sphi 0, %s249
      %s250 = sphi 0, %s247
      %s251 = sphi 0, %s250
      %s267 = sphi 0, %s251
      %s271 = sphi 0, %s271
      %s273 = sphi 0, %s271
      %s274 = sphi 0, %s273
      %s288 = sphi 0, %s274
      %s294 = sphi 0, %s296
      %s297 = sphi 0, %s294
      %s298 = sphi 0, %s297
      %s314 = sphi 0, %s298
      %s320 = sphi 0, %s322
      %s323 = sphi 0, %s320
      %s324 = sphi 0, %s323
      %s340 = sphi 0, %s324
      %s346 = sphi 0, %s348
      %s349 = sphi 0, %s346
      %s350 = sphi 0, %s349
      %s366 = sphi 0, %s350
      %s372 = sphi 0, %s374
      %s375 = sphi 0, %s372
      %s376 = sphi 0, %s375
      %s392 = sphi 0, %s376
      %s398 = sphi 0, %s400
      %s401 = sphi 0, %s398
      %s402 = sphi 0, %s401
      %s418 = sphi 0, %s402
    $region4: #{mlp_mixer_forward.1} parent=1 // loop_header_branch
      %30 = sbr.rel (%p28) target = $region8
    $region5: #{mlp_mixer_forward.1} parent=1 // loop_body
      %s32 = ssub.s32 %s27, 1
      %s33 = ssub.s32 %s27, 2
      %s40 = sadd.s32 1, %s35
      %p41 = scmp.ge.s32.totalorder %s40, 2
      %s42 = scalar_select %p41, 0, %s40
      %s43 = sadd.s32 1, %s34
      %s44 = scalar_select %p41, %s43, %s34
      %p45 = scmp.ge.s32.totalorder %s44, 2
      %s46 = scalar_select %p45, 0, %s44
      %s47 = ssub.s32 %s34, %s46
      %p48 = scmp.eq.s32.totalorder %s47, 0
      %s50 = sadd.s32 %s49, 1
      %s51 = scalar_select %p48, %s49, %s50
      %p54 = pneg %p48
      %p55 = scmp.eq.s32.totalorder %s27, 3
      %p56 = por %p54, %p55
      %p57 = scmp.ne.s32.totalorder %s49, %s52
      %p58 = scmp.eq.s32.totalorder %s27, 0
      %p59 = por %p57, %p58
      %p60 = scmp.ne.s32.totalorder %s49, %s52
      %p61 = scmp.eq.s32.totalorder %s32, 3
      %p62 = por %p60, %p61
      %p63 = scmp.ne.s32.totalorder %s52, %s53
      %p64 = scmp.eq.s32.totalorder %s32, 0
      %p65 = por %p63, %p64
      %p66 = scmp.ne.s32.totalorder %s52, %s53
      %p67 = scmp.eq.s32.totalorder %s33, 3
      %p68 = por %p66, %p67
      %p70 = scmp.ne.s32.totalorder %s53, %s69
      %p71 = scmp.eq.s32.totalorder %s33, 0
      %p72 = por %p70, %p71
      %s74 = sadd.s32 %s73, 1
      %p77 = scmp.eq.s32.totalorder %s27, 3
      %p78 = scmp.ne.s32.totalorder %s73, %s75
      %p79 = scmp.eq.s32.totalorder %s27, 0
      %p80 = por %p78, %p79
      %p81 = scmp.ne.s32.totalorder %s73, %s75
      %p82 = scmp.eq.s32.totalorder %s32, 3
      %p83 = por %p81, %p82
      %p84 = scmp.ne.s32.totalorder %s75, %s76
      %p85 = scmp.eq.s32.totalorder %s32, 0
      %p86 = por %p84, %p85
      %p87 = scmp.ne.s32.totalorder %s75, %s76
      %p88 = scmp.eq.s32.totalorder %s33, 3
      %p89 = por %p87, %p88
      %p91 = scmp.ne.s32.totalorder %s76, %s90
      %p92 = scmp.eq.s32.totalorder %s33, 0
      %p93 = por %p91, %p92
      %s95 = sadd.s32 %s94, 1
      %p98 = scmp.eq.s32.totalorder %s27, 3
      %p99 = scmp.ne.s32.totalorder %s94, %s96
      %p100 = scmp.eq.s32.totalorder %s27, 0
      %p101 = por %p99, %p100
      %p102 = scmp.ne.s32.totalorder %s94, %s96
      %p103 = scmp.eq.s32.totalorder %s32, 3
      %p104 = por %p102, %p103
      %p105 = scmp.ne.s32.totalorder %s96, %s97
      %p106 = scmp.eq.s32.totalorder %s32, 0
      %p107 = por %p105, %p106
      %p108 = scmp.ne.s32.totalorder %s96, %s97
      %p109 = scmp.eq.s32.totalorder %s33, 3
      %p110 = por %p108, %p109
      %p112 = scmp.ne.s32.totalorder %s97, %s111
      %p113 = scmp.eq.s32.totalorder %s33, 0
      %p114 = por %p112, %p113
      %s115 = ssub.s32 %s35, %s42
      %p116 = scmp.eq.s32.totalorder %s115, 0
      %s118 = sadd.s32 %s117, 1
      %s119 = scalar_select %p116, %s117, %s118
      %p122 = pneg %p116
      %p123 = scmp.eq.s32.totalorder %s27, 3
      %p124 = por %p122, %p123
      %p125 = scmp.ne.s32.totalorder %s117, %s120
      %p126 = scmp.eq.s32.totalorder %s27, 0
      %p127 = por %p125, %p126
      %p128 = scmp.ne.s32.totalorder %s117, %s120
      %p129 = scmp.eq.s32.totalorder %s32, 3
      %p130 = por %p128, %p129
      %p131 = scmp.ne.s32.totalorder %s120, %s121
      %p132 = scmp.eq.s32.totalorder %s32, 0
      %p133 = por %p131, %p132
      %p134 = scmp.ne.s32.totalorder %s120, %s121
      %p135 = scmp.eq.s32.totalorder %s33, 3
      %p136 = por %p134, %p135
      %p138 = scmp.ne.s32.totalorder %s121, %s137
      %p139 = scmp.eq.s32.totalorder %s33, 0
      %p140 = por %p138, %p139
      %s141 = ssub.s32 %s35, %s42
      %p142 = scmp.eq.s32.totalorder %s141, 0
      %s144 = sadd.s32 %s143, 1
      %s145 = scalar_select %p142, %s143, %s144
      %p148 = pneg %p142
      %p149 = scmp.eq.s32.totalorder %s27, 3
      %p150 = por %p148, %p149
      %p151 = scmp.ne.s32.totalorder %s143, %s146
      %p152 = scmp.eq.s32.totalorder %s27, 0
      %p153 = por %p151, %p152
      %p154 = scmp.ne.s32.totalorder %s143, %s146
      %p155 = scmp.eq.s32.totalorder %s32, 3
      %p156 = por %p154, %p155
      %p157 = scmp.ne.s32.totalorder %s146, %s147
      %p158 = scmp.eq.s32.totalorder %s32, 0
      %p159 = por %p157, %p158
      %p160 = scmp.ne.s32.totalorder %s146, %s147
      %p161 = scmp.eq.s32.totalorder %s33, 3
      %p162 = por %p160, %p161
      %p164 = scmp.ne.s32.totalorder %s147, %s163
      %p165 = scmp.eq.s32.totalorder %s33, 0
      %p166 = por %p164, %p165
      %s167 = ssub.s32 %s35, %s42
      %p168 = scmp.eq.s32.totalorder %s167, 0
      %s170 = sadd.s32 %s169, 1
      %s171 = scalar_select %p168, %s169, %s170
      %p174 = pneg %p168
      %p175 = scmp.eq.s32.totalorder %s27, 3
      %p176 = por %p174, %p175
      %p177 = scmp.ne.s32.totalorder %s169, %s172
      %p178 = scmp.eq.s32.totalorder %s27, 0
      %p179 = por %p177, %p178
      %p180 = scmp.ne.s32.totalorder %s169, %s172
      %p181 = scmp.eq.s32.totalorder %s32, 3
      %p182 = por %p180, %p181
      %p183 = scmp.ne.s32.totalorder %s172, %s173
      %p184 = scmp.eq.s32.totalorder %s32, 0
      %p185 = por %p183, %p184
      %p186 = scmp.ne.s32.totalorder %s172, %s173
      %p187 = scmp.eq.s32.totalorder %s33, 3
      %p188 = por %p186, %p187
      %p190 = scmp.ne.s32.totalorder %s173, %s189
      %p191 = scmp.eq.s32.totalorder %s33, 0
      %p192 = por %p190, %p191
      %s193 = ssub.s32 %s35, %s42
      %p194 = scmp.eq.s32.totalorder %s193, 0
      %s196 = sadd.s32 %s195, 1
      %s197 = scalar_select %p194, %s195, %s196
      %p200 = pneg %p194
      %p201 = scmp.eq.s32.totalorder %s27, 3
      %p202 = por %p200, %p201
      %p203 = scmp.ne.s32.totalorder %s195, %s198
      %p204 = scmp.eq.s32.totalorder %s27, 0
      %p205 = por %p203, %p204
      %p206 = scmp.ne.s32.totalorder %s195, %s198
      %p207 = scmp.eq.s32.totalorder %s32, 3
      %p208 = por %p206, %p207
      %p209 = scmp.ne.s32.totalorder %s198, %s199
      %p210 = scmp.eq.s32.totalorder %s32, 0
      %p211 = por %p209, %p210
      %p212 = scmp.ne.s32.totalorder %s198, %s199
      %p213 = scmp.eq.s32.totalorder %s33, 3
      %p214 = por %p212, %p213
      %p216 = scmp.ne.s32.totalorder %s199, %s215
      %p217 = scmp.eq.s32.totalorder %s33, 0
      %p218 = por %p216, %p217
      %s219 = ssub.s32 %s35, %s42
      %p220 = scmp.eq.s32.totalorder %s219, 0
      %s222 = sadd.s32 %s221, 1
      %s223 = scalar_select %p220, %s221, %s222
      %p226 = pneg %p220
      %p227 = scmp.eq.s32.totalorder %s27, 3
      %p228 = por %p226, %p227
      %p229 = scmp.ne.s32.totalorder %s221, %s224
      %p230 = scmp.eq.s32.totalorder %s27, 0
      %p231 = por %p229, %p230
      %p232 = scmp.ne.s32.totalorder %s221, %s224
      %p233 = scmp.eq.s32.totalorder %s32, 3
      %p234 = por %p232, %p233
      %p235 = scmp.ne.s32.totalorder %s224, %s225
      %p236 = scmp.eq.s32.totalorder %s32, 0
      %p237 = por %p235, %p236
      %p238 = scmp.ne.s32.totalorder %s224, %s225
      %p239 = scmp.eq.s32.totalorder %s33, 3
      %p240 = por %p238, %p239
      %p242 = scmp.ne.s32.totalorder %s225, %s241
      %p243 = scmp.eq.s32.totalorder %s33, 0
      %p244 = por %p242, %p243
      %s245 = ssub.s32 %s35, %s42
      %p246 = scmp.eq.s32.totalorder %s245, 0
      %s248 = sadd.s32 %s247, 1
      %s249 = scalar_select %p246, %s247, %s248
      %p252 = pneg %p246
      %p253 = scmp.eq.s32.totalorder %s27, 3
      %p254 = por %p252, %p253
      %p255 = scmp.ne.s32.totalorder %s247, %s250
      %p256 = scmp.eq.s32.totalorder %s27, 0
      %p257 = por %p255, %p256
      %p258 = scmp.ne.s32.totalorder %s247, %s250
      %p259 = scmp.eq.s32.totalorder %s32, 3
      %p260 = por %p258, %p259
      %p261 = scmp.ne.s32.totalorder %s250, %s251
      %p262 = scmp.eq.s32.totalorder %s32, 0
      %p263 = por %p261, %p262
      %p264 = scmp.ne.s32.totalorder %s250, %s251
      %p265 = scmp.eq.s32.totalorder %s33, 3
      %p266 = por %p264, %p265
      %p268 = scmp.ne.s32.totalorder %s251, %s267
      %p269 = scmp.eq.s32.totalorder %s33, 0
      %p270 = por %p268, %p269
      %s272 = sadd.s32 %s271, 1
      %p275 = scmp.eq.s32.totalorder %s27, 3
      %p276 = scmp.ne.s32.totalorder %s271, %s273
      %p277 = scmp.eq.s32.totalorder %s27, 0
      %p278 = por %p276, %p277
      %p279 = scmp.ne.s32.totalorder %s271, %s273
      %p280 = scmp.eq.s32.totalorder %s32, 3
      %p281 = por %p279, %p280
      %p282 = scmp.ne.s32.totalorder %s273, %s274
      %p283 = scmp.eq.s32.totalorder %s32, 0
      %p284 = por %p282, %p283
      %p285 = scmp.ne.s32.totalorder %s273, %s274
      %p286 = scmp.eq.s32.totalorder %s33, 3
      %p287 = por %p285, %p286
      %p289 = scmp.ne.s32.totalorder %s274, %s288
      %p290 = scmp.eq.s32.totalorder %s33, 0
      %p291 = por %p289, %p290
      %s292 = ssub.s32 %s35, %s42
      %p293 = scmp.eq.s32.totalorder %s292, 0
      %s295 = sadd.s32 %s294, 1
      %s296 = scalar_select %p293, %s294, %s295
      %p299 = pneg %p293
      %p300 = scmp.eq.s32.totalorder %s27, 3
      %p301 = por %p299, %p300
      %p302 = scmp.ne.s32.totalorder %s294, %s297
      %p303 = scmp.eq.s32.totalorder %s27, 0
      %p304 = por %p302, %p303
      %p305 = scmp.ne.s32.totalorder %s294, %s297
      %p306 = scmp.eq.s32.totalorder %s32, 3
      %p307 = por %p305, %p306
      %p308 = scmp.ne.s32.totalorder %s297, %s298
      %p309 = scmp.eq.s32.totalorder %s32, 0
      %p310 = por %p308, %p309
      %p311 = scmp.ne.s32.totalorder %s297, %s298
      %p312 = scmp.eq.s32.totalorder %s33, 3
      %p313 = por %p311, %p312
      %p315 = scmp.ne.s32.totalorder %s298, %s314
      %p316 = scmp.eq.s32.totalorder %s33, 0
      %p317 = por %p315, %p316
      %s318 = ssub.s32 %s35, %s42
      %p319 = scmp.eq.s32.totalorder %s318, 0
      %s321 = sadd.s32 %s320, 1
      %s322 = scalar_select %p319, %s320, %s321
      %p325 = pneg %p319
      %p326 = scmp.eq.s32.totalorder %s27, 3
      %p327 = por %p325, %p326
      %p328 = scmp.ne.s32.totalorder %s320, %s323
      %p329 = scmp.eq.s32.totalorder %s27, 0
      %p330 = por %p328, %p329
      %p331 = scmp.ne.s32.totalorder %s320, %s323
      %p332 = scmp.eq.s32.totalorder %s32, 3
      %p333 = por %p331, %p332
      %p334 = scmp.ne.s32.totalorder %s323, %s324
      %p335 = scmp.eq.s32.totalorder %s32, 0
      %p336 = por %p334, %p335
      %p337 = scmp.ne.s32.totalorder %s323, %s324
      %p338 = scmp.eq.s32.totalorder %s33, 3
      %p339 = por %p337, %p338
      %p341 = scmp.ne.s32.totalorder %s324, %s340
      %p342 = scmp.eq.s32.totalorder %s33, 0
      %p343 = por %p341, %p342
      %s344 = ssub.s32 %s35, %s42
      %p345 = scmp.eq.s32.totalorder %s344, 0
      %s347 = sadd.s32 %s346, 1
      %s348 = scalar_select %p345, %s346, %s347
      %p351 = pneg %p345
      %p352 = scmp.eq.s32.totalorder %s27, 3
      %p353 = por %p351, %p352
      %p354 = scmp.ne.s32.totalorder %s346, %s349
      %p355 = scmp.eq.s32.totalorder %s27, 0
      %p356 = por %p354, %p355
      %p357 = scmp.ne.s32.totalorder %s346, %s349
      %p358 = scmp.eq.s32.totalorder %s32, 3
      %p359 = por %p357, %p358
      %p360 = scmp.ne.s32.totalorder %s349, %s350
      %p361 = scmp.eq.s32.totalorder %s32, 0
      %p362 = por %p360, %p361
      %p363 = scmp.ne.s32.totalorder %s349, %s350
      %p364 = scmp.eq.s32.totalorder %s33, 3
      %p365 = por %p363, %p364
      %p367 = scmp.ne.s32.totalorder %s350, %s366
      %p368 = scmp.eq.s32.totalorder %s33, 0
      %p369 = por %p367, %p368
      %s370 = ssub.s32 %s35, %s42
      %p371 = scmp.eq.s32.totalorder %s370, 0
      %s373 = sadd.s32 %s372, 1
      %s374 = scalar_select %p371, %s372, %s373
      %p377 = pneg %p371
      %p378 = scmp.eq.s32.totalorder %s27, 3
      %p379 = por %p377, %p378
      %p380 = scmp.ne.s32.totalorder %s372, %s375
      %p381 = scmp.eq.s32.totalorder %s27, 0
      %p382 = por %p380, %p381
      %p383 = scmp.ne.s32.totalorder %s372, %s375
      %p384 = scmp.eq.s32.totalorder %s32, 3
      %p385 = por %p383, %p384
      %p386 = scmp.ne.s32.totalorder %s375, %s376
      %p387 = scmp.eq.s32.totalorder %s32, 0
      %p388 = por %p386, %p387
      %p389 = scmp.ne.s32.totalorder %s375, %s376
      %p390 = scmp.eq.s32.totalorder %s33, 3
      %p391 = por %p389, %p390
      %p393 = scmp.ne.s32.totalorder %s376, %s392
      %p394 = scmp.eq.s32.totalorder %s33, 0
      %p395 = por %p393, %p394
      %s396 = ssub.s32 %s34, %s46
      %p397 = scmp.eq.s32.totalorder %s396, 0
      %s399 = sadd.s32 %s398, 1
      %s400 = scalar_select %p397, %s398, %s399
      %p403 = pneg %p397
      %p404 = scmp.eq.s32.totalorder %s27, 3
      %p405 = por %p403, %p404
      %p406 = scmp.ne.s32.totalorder %s398, %s401
      %p407 = scmp.eq.s32.totalorder %s27, 0
      %p408 = por %p406, %p407
      %p409 = scmp.ne.s32.totalorder %s398, %s401
      %p410 = scmp.eq.s32.totalorder %s32, 3
      %p411 = por %p409, %p410
      %p412 = scmp.ne.s32.totalorder %s401, %s402
      %p413 = scmp.eq.s32.totalorder %s32, 0
      %p414 = por %p412, %p413
      %p415 = scmp.ne.s32.totalorder %s401, %s402
      %p416 = scmp.eq.s32.totalorder %s33, 3
      %p417 = por %p415, %p416
      %p419 = scmp.ne.s32.totalorder %s402, %s418
      %p420 = scmp.eq.s32.totalorder %s33, 0
      %p421 = por %p419, %p420
      %p422 = scmp.le.s32.totalorder 1, %s27
      %p423 = scmp.lt.s32.totalorder %s27, 5
      %p424 = pnand %p422, %p423
      %p425 = pneg %p424
      // Predicated region
      $region9: #{mlp_mixer_forward.1} parent=5 // pred_check
        _
      $region10: #{mlp_mixer_forward.1} parent=5 // pred_check_branch
        %427 = sbr.rel (%p424) target = $region12
      $region11: #{mlp_mixer_forward.1} parent=5 // pred_region
        %s428 = ssub.s32 %s27, 1
        // Predicated region
        $region13: #{mlp_mixer_forward.1} parent=11 // pred_check
          %p429 = pneg %p86
        $region14: #{mlp_mixer_forward.1} parent=11 // pred_check_branch
          %431 = sbr.rel (%p429) target = $region16
        $region15: #{mlp_mixer_forward.1} parent=11 // pred_region
          %433 = vsyncadd [#allocation3], 0
          %s434 = sshll.u32 %s1, 4
          %s435 = int_to_ptr.hbm [resolvable:$true] %s434
          %s436 = sshll.u32 [#allocation2], 4
          %s437 = int_to_ptr.vmem [resolvable:$true] %s436
          %442 = dma.hbm_to_vmem [thread:$0]  %s435, 3072, %s437, [#allocation3], 64, 64, 4
        $region16: #{mlp_mixer_forward.1} parent=11 // pred_fallthru
          _
        // Predicated region
        $region17: #{mlp_mixer_forward.1} parent=11 // pred_check
          %p443 = pneg %p107
        $region18: #{mlp_mixer_forward.1} parent=11 // pred_check_branch
          %445 = sbr.rel (%p443) target = $region20
        $region19: #{mlp_mixer_forward.1} parent=11 // pred_region
          _
        $region20: #{mlp_mixer_forward.1} parent=11 // pred_fallthru
          _
        // Predicated region
        $region21: #{mlp_mixer_forward.1} parent=11 // pred_check
          %p446 = pneg %p284
        $region22: #{mlp_mixer_forward.1} parent=11 // pred_check_branch
          %448 = sbr.rel (%p446) target = $region24
        $region23: #{mlp_mixer_forward.1} parent=11 // pred_region
          %450 = vsyncadd [#allocation5], 0
          %s451 = sshll.u32 %s9, 4
          %s452 = int_to_ptr.hbm [resolvable:$true] %s451
          %s453 = sshll.u32 [#allocation6], 4
          %s454 = int_to_ptr.vmem [resolvable:$true] %s453
          %459 = dma.hbm_to_vmem [thread:$0]  %s452, 2048, %s454, [#allocation5], 128, 128, 8
        $region24: #{mlp_mixer_forward.1} parent=11 // pred_fallthru
          _
      $region12: #{mlp_mixer_forward.1} parent=5 // pred_fallthru
        _
      %p460 = scmp.lt.s32.totalorder %s27, 4
      // Predicated region
      $region25: #{mlp_mixer_forward.1} parent=5 // pred_check
        %p461 = pneg %p460
      $region26: #{mlp_mixer_forward.1} parent=5 // pred_check_branch
        %463 = sbr.rel (%p461) target = $region28
      $region27: #{mlp_mixer_forward.1} parent=5 // pred_region
        // Predicated region
        $region29: #{mlp_mixer_forward.1} parent=27 // pred_check
          %p464 = pneg %p59
        $region30: #{mlp_mixer_forward.1} parent=27 // pred_check_branch
          %466 = sbr.rel (%p464) target = $region32
        $region31: #{mlp_mixer_forward.1} parent=27 // pred_region
          %p467 = scmp.lt.s32.totalorder %s34, 1
          %s468 = scalar_select %p467, %s34, 1
          %s469 = smul.addr %s468, 2
          %s470 = smul.addr %s469, 8
          %s471 = scalar_lea.vmem %s0, %s470
        $region32: #{mlp_mixer_forward.1} parent=27 // pred_fallthru
          _
        // Predicated region
        $region33: #{mlp_mixer_forward.1} parent=27 // pred_check
          %p472 = pneg %p127
        $region34: #{mlp_mixer_forward.1} parent=27 // pred_check_branch
          %474 = sbr.rel (%p472) target = $region36
        $region35: #{mlp_mixer_forward.1} parent=27 // pred_region
          %p475 = scmp.lt.s32.totalorder %s35, 1
          %s476 = scalar_select %p475, %s35, 1
          %s477 = smul.addr %s476, 48
          %s478 = smul.addr %s477, 4
          %s479 = scalar_lea.vmem %s3, %s478
        $region36: #{mlp_mixer_forward.1} parent=27 // pred_fallthru
          _
        // Predicated region
        $region37: #{mlp_mixer_forward.1} parent=27 // pred_check
          %p480 = pneg %p153
        $region38: #{mlp_mixer_forward.1} parent=27 // pred_check_branch
          %482 = sbr.rel (%p480) target = $region40
        $region39: #{mlp_mixer_forward.1} parent=27 // pred_region
          %p483 = scmp.lt.s32.totalorder %s35, 1
          %s484 = scalar_select %p483, %s35, 1
          %s485 = scalar_lea.vmem %s4, %s484
        $region40: #{mlp_mixer_forward.1} parent=27 // pred_fallthru
          _
        // Predicated region
        $region41: #{mlp_mixer_forward.1} parent=27 // pred_check
          %p486 = pneg %p179
        $region42: #{mlp_mixer_forward.1} parent=27 // pred_check_branch
          %488 = sbr.rel (%p486) target = $region44
        $region43: #{mlp_mixer_forward.1} parent=27 // pred_region
          %s489 = sand.u32 %s27, 1
          %s490 = scalar_lea.sflag [#allocation5], %s489
          %s491 = sand.u32 %s169, 1
          %s492 = smul.addr %s491, 192
          %s493 = scalar_lea.vmem [#allocation4], %s492
          %495 = vsyncadd %s490, 0
          %s496 = smul.addr %s35, 48
          %s497 = smul.addr %s496, 4
          %s498 = scalar_lea.hbm %s5, %s497
          %s499 = sshll.u32 %s498, 4
          %s500 = int_to_ptr.hbm [resolvable:$true] %s499
          %s501 = sshll.u32 %s493, 4
          %s502 = int_to_ptr.vmem [resolvable:$true] %s501
          %507 = dma.hbm_to_vmem [thread:$0]  %s500, 3072, %s502, %s490, 64, 64, 4
        $region44: #{mlp_mixer_forward.1} parent=27 // pred_fallthru
          _
        // Predicated region
        $region45: #{mlp_mixer_forward.1} parent=27 // pred_check
          %p508 = pneg %p205
        $region46: #{mlp_mixer_forward.1} parent=27 // pred_check_branch
          %510 = sbr.rel (%p508) target = $region48
        $region47: #{mlp_mixer_forward.1} parent=27 // pred_region
          %p511 = scmp.lt.s32.totalorder %s35, 1
          %s512 = scalar_select %p511, %s35, 1
          %s513 = scalar_lea.vmem %s6, %s512
        $region48: #{mlp_mixer_forward.1} parent=27 // pred_fallthru
          _
        // Predicated region
        $region49: #{mlp_mixer_forward.1} parent=27 // pred_check
          %p514 = pneg %p231
        $region50: #{mlp_mixer_forward.1} parent=27 // pred_check_branch
          %516 = sbr.rel (%p514) target = $region52
        $region51: #{mlp_mixer_forward.1} parent=27 // pred_region
          %p517 = scmp.lt.s32.totalorder %s35, 1
          %s518 = scalar_select %p517, %s35, 1
          %s519 = scalar_lea.vmem %s7, %s518
        $region52: #{mlp_mixer_forward.1} parent=27 // pred_fallthru
          _
        // Predicated region
        $region53: #{mlp_mixer_forward.1} parent=27 // pred_check
          %p520 = pneg %p257
        $region54: #{mlp_mixer_forward.1} parent=27 // pred_check_branch
          %522 = sbr.rel (%p520) target = $region56
        $region55: #{mlp_mixer_forward.1} parent=27 // pred_region
          %p523 = scmp.lt.s32.totalorder %s35, 1
          %s524 = scalar_select %p523, %s35, 1
          %s525 = scalar_lea.vmem %s8, %s524
        $region56: #{mlp_mixer_forward.1} parent=27 // pred_fallthru
          _
        // Predicated region
        $region57: #{mlp_mixer_forward.1} parent=27 // pred_check
          %p526 = pneg %p304
        $region58: #{mlp_mixer_forward.1} parent=27 // pred_check_branch
          %528 = sbr.rel (%p526) target = $region60
        $region59: #{mlp_mixer_forward.1} parent=27 // pred_region
          %p529 = scmp.lt.s32.totalorder %s35, 1
          %s530 = scalar_select %p529, %s35, 1
          %s531 = smul.addr %s530, 64
          %s532 = smul.addr %s531, 4
          %s533 = scalar_lea.vmem %s10, %s532
        $region60: #{mlp_mixer_forward.1} parent=27 // pred_fallthru
          _
        // Predicated region
        $region61: #{mlp_mixer_forward.1} parent=27 // pred_check
          %p534 = pneg %p330
        $region62: #{mlp_mixer_forward.1} parent=27 // pred_check_branch
          %536 = sbr.rel (%p534) target = $region64
        $region63: #{mlp_mixer_forward.1} parent=27 // pred_region
          %p537 = scmp.lt.s32.totalorder %s35, 1
          %s538 = scalar_select %p537, %s35, 1
          %s539 = smul.addr %s538, 4
          %s540 = scalar_lea.vmem %s11, %s539
        $region64: #{mlp_mixer_forward.1} parent=27 // pred_fallthru
          _
        // Predicated region
        $region65: #{mlp_mixer_forward.1} parent=27 // pred_check
          %p541 = pneg %p356
        $region66: #{mlp_mixer_forward.1} parent=27 // pred_check_branch
          %543 = sbr.rel (%p541) target = $region68
        $region67: #{mlp_mixer_forward.1} parent=27 // pred_region
          %s544 = sand.u32 %s346, 1
          %s545 = scalar_lea.sflag [#allocation8], %s544
          %s546 = sand.u32 %s346, 1
          %s547 = smul.addr %s546, 256
          %s548 = scalar_lea.vmem [#allocation7], %s547
          %550 = vsyncadd %s545, 0
          %s551 = smul.addr %s35, 64
          %s552 = smul.addr %s551, 4
          %s553 = scalar_lea.hbm %s12, %s552
          %s554 = sshll.u32 %s553, 4
          %s555 = int_to_ptr.hbm [resolvable:$true] %s554
          %s556 = sshll.u32 %s548, 4
          %s557 = int_to_ptr.vmem [resolvable:$true] %s556
          %562 = dma.hbm_to_vmem [thread:$0]  %s555, 4096, %s557, %s545, 64, 64, 4
        $region68: #{mlp_mixer_forward.1} parent=27 // pred_fallthru
          _
        // Predicated region
        $region69: #{mlp_mixer_forward.1} parent=27 // pred_check
          %p563 = pneg %p382
        $region70: #{mlp_mixer_forward.1} parent=27 // pred_check_branch
          %565 = sbr.rel (%p563) target = $region72
        $region71: #{mlp_mixer_forward.1} parent=27 // pred_region
          %p566 = scmp.lt.s32.totalorder %s35, 1
          %s567 = scalar_select %p566, %s35, 1
          %s568 = scalar_lea.vmem %s13, %s567
        $region72: #{mlp_mixer_forward.1} parent=27 // pred_fallthru
          _
      $region28: #{mlp_mixer_forward.1} parent=5 // pred_fallthru
        _
      %p569 = scmp.le.s32.totalorder 1, %s27
      %p570 = scmp.lt.s32.totalorder %s27, 5
      %p571 = pnand %p569, %p570
      %p572 = pneg %p571
      // Predicated region
      $region73: #{mlp_mixer_forward.1} parent=5 // pred_check
        _
      $region74: #{mlp_mixer_forward.1} parent=5 // pred_check_branch
        %574 = sbr.rel (%p571) target = $region76
      $region75: #{mlp_mixer_forward.1} parent=5 // pred_region
        %s575 = ssub.s32 %s27, 1
        // Predicated region
        $region77: #{mlp_mixer_forward.1} parent=75 // pred_check
          %p576 = pneg %p86
        $region78: #{mlp_mixer_forward.1} parent=75 // pred_check_branch
          %578 = sbr.rel (%p576) target = $region80
        $region79: #{mlp_mixer_forward.1} parent=75 // pred_region
          %580 = dma.done [#allocation3], 3072
        $region80: #{mlp_mixer_forward.1} parent=75 // pred_fallthru
          _
        %s581 = sand.u32 %s32, 1
        %s582 = scalar_lea.sflag [#allocation5], %s581
        %s583 = sand.u32 %s172, 1
        %s584 = smul.addr %s583, 192
        %s585 = scalar_lea.vmem [#allocation4], %s584
        // Predicated region
        $region81: #{mlp_mixer_forward.1} parent=75 // pred_check
          %p586 = pneg %p185
        $region82: #{mlp_mixer_forward.1} parent=75 // pred_check_branch
          %588 = sbr.rel (%p586) target = $region84
        $region83: #{mlp_mixer_forward.1} parent=75 // pred_region
          %590 = dma.done %s582, 3072
        $region84: #{mlp_mixer_forward.1} parent=75 // pred_fallthru
          _
        // Predicated region
        $region85: #{mlp_mixer_forward.1} parent=75 // pred_check
          %p591 = pneg %p284
        $region86: #{mlp_mixer_forward.1} parent=75 // pred_check_branch
          %593 = sbr.rel (%p591) target = $region88
        $region87: #{mlp_mixer_forward.1} parent=75 // pred_region
          %595 = dma.done [#allocation5], 2048
        $region88: #{mlp_mixer_forward.1} parent=75 // pred_fallthru
          _
        %s596 = sand.u32 %s349, 1
        %s597 = scalar_lea.sflag [#allocation8], %s596
        %s598 = sand.u32 %s349, 1
        %s599 = smul.addr %s598, 256
        %s600 = scalar_lea.vmem [#allocation7], %s599
        // Predicated region
        $region89: #{mlp_mixer_forward.1} parent=75 // pred_check
          %p601 = pneg %p362
        $region90: #{mlp_mixer_forward.1} parent=75 // pred_check_branch
          %603 = sbr.rel (%p601) target = $region92
        $region91: #{mlp_mixer_forward.1} parent=75 // pred_region
          %605 = dma.done %s597, 4096
        $region92: #{mlp_mixer_forward.1} parent=75 // pred_fallthru
          _
        %p606 = scmp.lt.s32.totalorder %s36, 1
        %s607 = scalar_select %p606, %s36, 1
        %s608 = smul.addr %s607, 2
        %s609 = smul.addr %s608, 8
        %s610 = scalar_lea.vmem %s0, %s609
        %p611 = pneg %p65
        %p612 = pneg %p62
        %p613 = pneg %p86
        %p614 = pneg %p83
        %p615 = pneg %p107
        %p616 = pneg %p104
        %p617 = scmp.lt.s32.totalorder %s37, 1
        %s618 = scalar_select %p617, %s37, 1
        %s619 = smul.addr %s618, 48
        %s620 = smul.addr %s619, 4
        %s621 = scalar_lea.vmem %s3, %s620
        %p622 = pneg %p133
        %p623 = pneg %p130
        %p624 = scmp.lt.s32.totalorder %s37, 1
        %s625 = scalar_select %p624, %s37, 1
        %s626 = scalar_lea.vmem %s4, %s625
        %p627 = pneg %p159
        %p628 = pneg %p156
        %s629 = sand.u32 %s32, 1
        %s630 = scalar_lea.sflag [#allocation5], %s629
        %s631 = sand.u32 %s172, 1
        %s632 = smul.addr %s631, 192
        %s633 = scalar_lea.vmem [#allocation4], %s632
        %p634 = pneg %p185
        %p635 = pneg %p182
        %p636 = scmp.lt.s32.totalorder %s37, 1
        %s637 = scalar_select %p636, %s37, 1
        %s638 = scalar_lea.vmem %s6, %s637
        %p639 = pneg %p211
        %p640 = pneg %p208
        %p641 = scmp.lt.s32.totalorder %s37, 1
        %s642 = scalar_select %p641, %s37, 1
        %s643 = scalar_lea.vmem %s7, %s642
        %p644 = pneg %p237
        %p645 = pneg %p234
        %p646 = scmp.lt.s32.totalorder %s37, 1
        %s647 = scalar_select %p646, %s37, 1
        %s648 = scalar_lea.vmem %s8, %s647
        %p649 = pneg %p263
        %p650 = pneg %p260
        %p651 = pneg %p284
        %p652 = pneg %p281
        %p653 = scmp.lt.s32.totalorder %s37, 1
        %s654 = scalar_select %p653, %s37, 1
        %s655 = smul.addr %s654, 64
        %s656 = smul.addr %s655, 4
        %s657 = scalar_lea.vmem %s10, %s656
        %p658 = pneg %p310
        %p659 = pneg %p307
        %p660 = scmp.lt.s32.totalorder %s37, 1
        %s661 = scalar_select %p660, %s37, 1
        %s662 = smul.addr %s661, 4
        %s663 = scalar_lea.vmem %s11, %s662
        %p664 = pneg %p336
        %p665 = pneg %p333
        %s666 = sand.u32 %s349, 1
        %s667 = scalar_lea.sflag [#allocation8], %s666
        %s668 = sand.u32 %s349, 1
        %s669 = smul.addr %s668, 256
        %s670 = scalar_lea.vmem [#allocation7], %s669
        %p671 = pneg %p362
        %p672 = pneg %p359
        %p673 = scmp.lt.s32.totalorder %s37, 1
        %s674 = scalar_select %p673, %s37, 1
        %s675 = scalar_lea.vmem %s13, %s674
        %p676 = pneg %p388
        %p677 = pneg %p385
        %p678 = pneg %p414
        %p679 = pneg %p411
        %p680 = scmp.lt.s32.totalorder %s36, 1
        %s681 = scalar_select %p680, %s36, 1
        %s682 = smul.addr %s681, 2
        %s683 = smul.addr %s682, 8
        %s684 = scalar_lea.vmem %s14, %s683
        %p685 = scmp.lt.s32.totalorder %s36, 1
        %s686 = scalar_select %p685, %s36, 1
        %s687 = smul.addr %s686, 2
        %s688 = smul.addr %s687, 8
        %s689 = scalar_lea.vmem %s0, %s688
        %p690 = scmp.lt.s32.totalorder %s37, 1
        %s691 = scalar_select %p690, %s37, 1
        %s692 = smul.addr %s691, 48
        %s693 = smul.addr %s692, 4
        %s694 = scalar_lea.vmem %s3, %s693
        %p695 = scmp.lt.s32.totalorder %s37, 1
        %s696 = scalar_select %p695, %s37, 1
        %s697 = scalar_lea.vmem %s4, %s696
        %p698 = scmp.lt.s32.totalorder %s37, 1
        %s699 = scalar_select %p698, %s37, 1
        %s700 = scalar_lea.vmem %s6, %s699
        %p701 = scmp.lt.s32.totalorder %s37, 1
        %s702 = scalar_select %p701, %s37, 1
        %s703 = scalar_lea.vmem %s7, %s702
        %p704 = scmp.lt.s32.totalorder %s37, 1
        %s705 = scalar_select %p704, %s37, 1
        %s706 = scalar_lea.vmem %s8, %s705
        %p707 = scmp.lt.s32.totalorder %s37, 1
        %s708 = scalar_select %p707, %s37, 1
        %s709 = smul.addr %s708, 64
        %s710 = smul.addr %s709, 4
        %s711 = scalar_lea.vmem %s10, %s710
        %p712 = scmp.lt.s32.totalorder %s37, 1
        %s713 = scalar_select %p712, %s37, 1
        %s714 = smul.addr %s713, 4
        %s715 = scalar_lea.vmem %s11, %s714
        %p716 = scmp.lt.s32.totalorder %s37, 1
        %s717 = scalar_select %p716, %s37, 1
        %s718 = scalar_lea.vmem %s13, %s717
        %p719 = scmp.lt.s32.totalorder %s36, 1
        %s720 = scalar_select %p719, %s36, 1
        %s721 = smul.addr %s720, 2
        %s722 = smul.addr %s721, 8
        %s723 = scalar_lea.vmem %s14, %s722
        %p724 = scmp.eq.s32.totalorder %s37, 0
        // Predicated region
        $region93: #{mlp_mixer_forward.1} parent=75 // pred_check
          %p725 = pneg %p724
        $region94: #{mlp_mixer_forward.1} parent=75 // pred_check_branch
          %727 = sbr.rel (%p725) target = $region96
        $region95: #{mlp_mixer_forward.1} parent=75 // pred_region
          %v728 = vld [vmem:[%s689] sm:$0xff]
          %v729 = vld [vmem:[%s689 + $0x8] sm:$0xff]
          %vm732 = vcmask 1040384
          %v733 = vrot.slane %v728, 7
          %v734 = vrot.slane %v729, 7
          %v735 = vsel %vm732, %v733, %v734
          %v738 = vsel %vm732, 0.0, %v733
          %vm739 = vcmask 1046528
          %v740 = vrot.slane %v728, 1
          %v741 = vrot.slane %v729, 1
          %v742 = vsel %vm739, %v740, %v741
          %v745 = vsel %vm739, %v741, 0.0
          %v746 = vpack.c.bf16 %v735, %v738
          %v747 = vld [vmem:[#allocation2] sm:$0xf]
          %v748 = vld [vmem:[#allocation2 + $0x4] sm:$0xf]
          %v749 = vld [vmem:[#allocation2 + $0x8] sm:$0xf]
          %v750 = vld [vmem:[#allocation2 + $0xc] sm:$0xf]
          %v751 = vld [vmem:[#allocation2 + $0x10] sm:$0xf]
          %v752 = vld [vmem:[#allocation2 + $0x14] sm:$0xf]
          %v753 = vld [vmem:[#allocation2 + $0x18] sm:$0xf]
          %v754 = vld [vmem:[#allocation2 + $0x1c] sm:$0xf]
          %v755 = vld [vmem:[#allocation2 + $0x20] sm:$0xf]
          %v756 = vld [vmem:[#allocation2 + $0x24] sm:$0xf]
          %v757 = vld [vmem:[#allocation2 + $0x28] sm:$0xf]
          %v758 = vld [vmem:[#allocation2 + $0x2c] sm:$0xf]
          %v759 = vld [vmem:[#allocation2 + $0x30] sm:$0xf]
          %v760 = vld [vmem:[#allocation2 + $0x34] sm:$0xf]
          %v761 = vld [vmem:[#allocation2 + $0x38] sm:$0xf]
          %v762 = vld [vmem:[#allocation2 + $0x3c] sm:$0xf]
          %v763 = vpack.c.bf16 %v729, %v728
          %s764 = scalar_lea.vmem [#allocation2], 64
          %v765 = vld [vmem:[%s764] sm:$0xf]
          %v766 = vld [vmem:[%s764 + $0x4] sm:$0xf]
          %v767 = vld [vmem:[%s764 + $0x8] sm:$0xf]
          %v768 = vld [vmem:[%s764 + $0xc] sm:$0xf]
          %v769 = vld [vmem:[%s764 + $0x10] sm:$0xf]
          %v770 = vld [vmem:[%s764 + $0x14] sm:$0xf]
          %v771 = vld [vmem:[%s764 + $0x18] sm:$0xf]
          %v772 = vld [vmem:[%s764 + $0x1c] sm:$0xf]
          %v773 = vld [vmem:[%s764 + $0x20] sm:$0xf]
          %v774 = vld [vmem:[%s764 + $0x24] sm:$0xf]
          %v775 = vld [vmem:[%s764 + $0x28] sm:$0xf]
          %v776 = vld [vmem:[%s764 + $0x2c] sm:$0xf]
          %v777 = vld [vmem:[%s764 + $0x30] sm:$0xf]
          %v778 = vld [vmem:[%s764 + $0x34] sm:$0xf]
          %v779 = vld [vmem:[%s764 + $0x38] sm:$0xf]
          %v780 = vld [vmem:[%s764 + $0x3c] sm:$0xf]
          %v797 = vunpack.c.l.b16 %v765
          %v798 = vunpack.c.l.b16 %v766
          %v799 = vunpack.c.l.b16 %v767
          %v800 = vunpack.c.l.b16 %v768
          %v801 = vunpack.c.l.b16 %v769
          %v802 = vunpack.c.l.b16 %v770
          %v803 = vunpack.c.l.b16 %v771
          %v804 = vunpack.c.l.b16 %v772
          %v805 = vunpack.c.l.b16 %v773
          %v806 = vunpack.c.l.b16 %v774
          %v807 = vunpack.c.l.b16 %v775
          %v808 = vunpack.c.l.b16 %v776
          %v809 = vunpack.c.l.b16 %v777
          %v810 = vunpack.c.l.b16 %v778
          %v811 = vunpack.c.l.b16 %v779
          %v812 = vunpack.c.l.b16 %v780
          %v813 = vpack.c.b16 %v798, %v797
          %v814 = vpack.c.b16 %v800, %v799
          %v815 = vpack.c.b16 %v802, %v801
          %v816 = vpack.c.b16 %v804, %v803
          %v817 = vpack.c.b16 %v806, %v805
          %v818 = vpack.c.b16 %v808, %v807
          %v819 = vpack.c.b16 %v810, %v809
          %v820 = vpack.c.b16 %v812, %v811
          %829 = vmatpush.bf16.msra.mxu0 %v820
          %830 = vmatpush.bf16.msra.mxu0 %v819
          %831 = vmatpush.bf16.msra.mxu0 %v818
          %832 = vmatpush.bf16.msra.mxu0 %v817
          %833 = vmatpush.bf16.msra.mxu0 %v816
          %834 = vmatpush.bf16.msra.mxu0 %v815
          %835 = vmatpush.bf16.msra.mxu0 %v814
          %836 = vmatpush.bf16.msra.mxu0 %v813
          %837 = vmatmul.bf16.gmra.mxu0 %v763
          %v838 = vpop.f32.mrf.mxu0
          %v839 = vadd.f32 0.0, %v838
          %v840 = vpop.f32.mrf.mxu0
          %v841 = vadd.f32 0.0, %v840
          %842 = vdwg.mxu0
          %v859 = vunpack.c.l.b16 %v747
          %v860 = vunpack.c.l.b16 %v748
          %v861 = vunpack.c.l.b16 %v749
          %v862 = vunpack.c.l.b16 %v750
          %v863 = vunpack.c.l.b16 %v751
          %v864 = vunpack.c.l.b16 %v752
          %v865 = vunpack.c.l.b16 %v753
          %v866 = vunpack.c.l.b16 %v754
          %v867 = vunpack.c.l.b16 %v755
          %v868 = vunpack.c.l.b16 %v756
          %v869 = vunpack.c.l.b16 %v757
          %v870 = vunpack.c.l.b16 %v758
          %v871 = vunpack.c.l.b16 %v759
          %v872 = vunpack.c.l.b16 %v760
          %v873 = vunpack.c.l.b16 %v761
          %v874 = vunpack.c.l.b16 %v762
          %v875 = vpack.c.b16 %v860, %v859
          %v876 = vpack.c.b16 %v862, %v861
          %v877 = vpack.c.b16 %v864, %v863
          %v878 = vpack.c.b16 %v866, %v865
          %v879 = vpack.c.b16 %v868, %v867
          %v880 = vpack.c.b16 %v870, %v869
          %v881 = vpack.c.b16 %v872, %v871
          %v882 = vpack.c.b16 %v874, %v873
          %891 = vmatpush.bf16.msra.mxu0 %v882
          %892 = vmatpush.bf16.msra.mxu0 %v881
          %893 = vmatpush.bf16.msra.mxu0 %v880
          %894 = vmatpush.bf16.msra.mxu0 %v879
          %895 = vmatpush.bf16.msra.mxu0 %v878
          %896 = vmatpush.bf16.msra.mxu0 %v877
          %897 = vmatpush.bf16.msra.mxu0 %v876
          %898 = vmatpush.bf16.msra.mxu0 %v875
          %899 = vmatmul.bf16.gmra.mxu0 %v746
          %v900 = vpop.f32.mrf.mxu0
          %v901 = vadd.f32 %v839, %v900
          %v902 = vpop.f32.mrf.mxu0
          %v903 = vadd.f32 %v841, %v902
          %904 = vdwg.mxu0
          %v905 = vpack.c.bf16 %v745, %v742
          %s906 = scalar_lea.vmem [#allocation2], 128
          %v907 = vld [vmem:[%s906] sm:$0xf]
          %v908 = vld [vmem:[%s906 + $0x4] sm:$0xf]
          %v909 = vld [vmem:[%s906 + $0x8] sm:$0xf]
          %v910 = vld [vmem:[%s906 + $0xc] sm:$0xf]
          %v911 = vld [vmem:[%s906 + $0x10] sm:$0xf]
          %v912 = vld [vmem:[%s906 + $0x14] sm:$0xf]
          %v913 = vld [vmem:[%s906 + $0x18] sm:$0xf]
          %v914 = vld [vmem:[%s906 + $0x1c] sm:$0xf]
          %v915 = vld [vmem:[%s906 + $0x20] sm:$0xf]
          %v916 = vld [vmem:[%s906 + $0x24] sm:$0xf]
          %v917 = vld [vmem:[%s906 + $0x28] sm:$0xf]
          %v918 = vld [vmem:[%s906 + $0x2c] sm:$0xf]
          %v919 = vld [vmem:[%s906 + $0x30] sm:$0xf]
          %v920 = vld [vmem:[%s906 + $0x34] sm:$0xf]
          %v921 = vld [vmem:[%s906 + $0x38] sm:$0xf]
          %v922 = vld [vmem:[%s906 + $0x3c] sm:$0xf]
          %v939 = vunpack.c.l.b16 %v907
          %v940 = vunpack.c.l.b16 %v908
          %v941 = vunpack.c.l.b16 %v909
          %v942 = vunpack.c.l.b16 %v910
          %v943 = vunpack.c.l.b16 %v911
          %v944 = vunpack.c.l.b16 %v912
          %v945 = vunpack.c.l.b16 %v913
          %v946 = vunpack.c.l.b16 %v914
          %v947 = vunpack.c.l.b16 %v915
          %v948 = vunpack.c.l.b16 %v916
          %v949 = vunpack.c.l.b16 %v917
          %v950 = vunpack.c.l.b16 %v918
          %v951 = vunpack.c.l.b16 %v919
          %v952 = vunpack.c.l.b16 %v920
          %v953 = vunpack.c.l.b16 %v921
          %v954 = vunpack.c.l.b16 %v922
          %v955 = vpack.c.b16 %v940, %v939
          %v956 = vpack.c.b16 %v942, %v941
          %v957 = vpack.c.b16 %v944, %v943
          %v958 = vpack.c.b16 %v946, %v945
          %v959 = vpack.c.b16 %v948, %v947
          %v960 = vpack.c.b16 %v950, %v949
          %v961 = vpack.c.b16 %v952, %v951
          %v962 = vpack.c.b16 %v954, %v953
          %971 = vmatpush.bf16.msra.mxu0 %v962
          %972 = vmatpush.bf16.msra.mxu0 %v961
          %973 = vmatpush.bf16.msra.mxu0 %v960
          %974 = vmatpush.bf16.msra.mxu0 %v959
          %975 = vmatpush.bf16.msra.mxu0 %v958
          %976 = vmatpush.bf16.msra.mxu0 %v957
          %977 = vmatpush.bf16.msra.mxu0 %v956
          %978 = vmatpush.bf16.msra.mxu0 %v955
          %979 = vmatmul.bf16.gmra.mxu0 %v905
          %v980 = vpop.f32.mrf.mxu0
          %v981 = vadd.f32 0.0, %v980
          %v982 = vpop.f32.mrf.mxu0
          %v983 = vadd.f32 0.0, %v982
          %984 = vdwg.mxu0
          %v985 = vadd.f32 %v901, %v981
          %v986 = vadd.f32 %v903, %v983
          %v987 = vld [vmem:[%s2] sm:$0x1]
          %v989 = vperm.slane %v987, 0
          %v991 = vadd.f32 %v985, %v989
          %v992 = vadd.f32 %v986, %v989
          %993 = vst [vmem:[%s723] sm:$0xff] %v991
          %994 = vst [vmem:[%s723 + $0x8] sm:$0xff] %v992
        $region96: #{mlp_mixer_forward.1} parent=75 // pred_fallthru
          _
        %v995 = vld [vmem:[%s723] sm:$0xff]
        %v996 = vld [vmem:[%s723 + $0x8] sm:$0xff]
        %vm999 = vcmask 1040384
        %v1000 = vrot.slane %v995, 7
        %v1001 = vrot.slane %v996, 7
        %v1002 = vsel %vm999, %v1000, %v1001
        %v1005 = vsel %vm999, 0.0, %v1000
        %vm1006 = vcmask 1046528
        %v1007 = vrot.slane %v995, 1
        %v1008 = vrot.slane %v996, 1
        %v1009 = vsel %vm1006, %v1007, %v1008
        %v1012 = vsel %vm1006, %v1008, 0.0
        %v1013 = vpack.c.bf16 %v1002, %v1005
        %v1014 = vld [vmem:[%s694] sm:$0xf]
        %v1015 = vld [vmem:[%s694 + $0x4] sm:$0xf]
        %v1016 = vld [vmem:[%s694 + $0x8] sm:$0xf]
        %v1017 = vld [vmem:[%s694 + $0xc] sm:$0xf]
        %v1018 = vld [vmem:[%s694 + $0x10] sm:$0xf]
        %v1019 = vld [vmem:[%s694 + $0x14] sm:$0xf]
        %v1020 = vld [vmem:[%s694 + $0x18] sm:$0xf]
        %v1021 = vld [vmem:[%s694 + $0x1c] sm:$0xf]
        %v1022 = vld [vmem:[%s694 + $0x20] sm:$0xf]
        %v1023 = vld [vmem:[%s694 + $0x24] sm:$0xf]
        %v1024 = vld [vmem:[%s694 + $0x28] sm:$0xf]
        %v1025 = vld [vmem:[%s694 + $0x2c] sm:$0xf]
        %v1026 = vld [vmem:[%s694 + $0x30] sm:$0xf]
        %v1027 = vld [vmem:[%s694 + $0x34] sm:$0xf]
        %v1028 = vld [vmem:[%s694 + $0x38] sm:$0xf]
        %v1029 = vld [vmem:[%s694 + $0x3c] sm:$0xf]
        %v1030 = vpack.c.bf16 %v996, %v995
        %s1031 = scalar_lea.vmem %s694, 64
        %v1032 = vld [vmem:[%s1031] sm:$0xf]
        %v1033 = vld [vmem:[%s1031 + $0x4] sm:$0xf]
        %v1034 = vld [vmem:[%s1031 + $0x8] sm:$0xf]
        %v1035 = vld [vmem:[%s1031 + $0xc] sm:$0xf]
        %v1036 = vld [vmem:[%s1031 + $0x10] sm:$0xf]
        %v1037 = vld [vmem:[%s1031 + $0x14] sm:$0xf]
        %v1038 = vld [vmem:[%s1031 + $0x18] sm:$0xf]
        %v1039 = vld [vmem:[%s1031 + $0x1c] sm:$0xf]
        %v1040 = vld [vmem:[%s1031 + $0x20] sm:$0xf]
        %v1041 = vld [vmem:[%s1031 + $0x24] sm:$0xf]
        %v1042 = vld [vmem:[%s1031 + $0x28] sm:$0xf]
        %v1043 = vld [vmem:[%s1031 + $0x2c] sm:$0xf]
        %v1044 = vld [vmem:[%s1031 + $0x30] sm:$0xf]
        %v1045 = vld [vmem:[%s1031 + $0x34] sm:$0xf]
        %v1046 = vld [vmem:[%s1031 + $0x38] sm:$0xf]
        %v1047 = vld [vmem:[%s1031 + $0x3c] sm:$0xf]
        %v1064 = vunpack.c.l.b16 %v1032
        %v1065 = vunpack.c.l.b16 %v1033
        %v1066 = vunpack.c.l.b16 %v1034
        %v1067 = vunpack.c.l.b16 %v1035
        %v1068 = vunpack.c.l.b16 %v1036
        %v1069 = vunpack.c.l.b16 %v1037
        %v1070 = vunpack.c.l.b16 %v1038
        %v1071 = vunpack.c.l.b16 %v1039
        %v1072 = vunpack.c.l.b16 %v1040
        %v1073 = vunpack.c.l.b16 %v1041
        %v1074 = vunpack.c.l.b16 %v1042
        %v1075 = vunpack.c.l.b16 %v1043
        %v1076 = vunpack.c.l.b16 %v1044
        %v1077 = vunpack.c.l.b16 %v1045
        %v1078 = vunpack.c.l.b16 %v1046
        %v1079 = vunpack.c.l.b16 %v1047
        %v1080 = vpack.c.b16 %v1065, %v1064
        %v1081 = vpack.c.b16 %v1067, %v1066
        %v1082 = vpack.c.b16 %v1069, %v1068
        %v1083 = vpack.c.b16 %v1071, %v1070
        %v1084 = vpack.c.b16 %v1073, %v1072
        %v1085 = vpack.c.b16 %v1075, %v1074
        %v1086 = vpack.c.b16 %v1077, %v1076
        %v1087 = vpack.c.b16 %v1079, %v1078
        %1096 = vmatpush.bf16.msra.mxu0 %v1087
        %1097 = vmatpush.bf16.msra.mxu0 %v1086
        %1098 = vmatpush.bf16.msra.mxu0 %v1085
        %1099 = vmatpush.bf16.msra.mxu0 %v1084
        %1100 = vmatpush.bf16.msra.mxu0 %v1083
        %1101 = vmatpush.bf16.msra.mxu0 %v1082
        %1102 = vmatpush.bf16.msra.mxu0 %v1081
        %1103 = vmatpush.bf16.msra.mxu0 %v1080
        %1104 = vmatmul.bf16.gmra.mxu0 %v1030
        %v1105 = vpop.f32.mrf.mxu0
        %v1106 = vadd.f32 0.0, %v1105
        %v1107 = vpop.f32.mrf.mxu0
        %v1108 = vadd.f32 0.0, %v1107
        %1109 = vdwg.mxu0
        %v1126 = vunpack.c.l.b16 %v1014
        %v1127 = vunpack.c.l.b16 %v1015
        %v1128 = vunpack.c.l.b16 %v1016
        %v1129 = vunpack.c.l.b16 %v1017
        %v1130 = vunpack.c.l.b16 %v1018
        %v1131 = vunpack.c.l.b16 %v1019
        %v1132 = vunpack.c.l.b16 %v1020
        %v1133 = vunpack.c.l.b16 %v1021
        %v1134 = vunpack.c.l.b16 %v1022
        %v1135 = vunpack.c.l.b16 %v1023
        %v1136 = vunpack.c.l.b16 %v1024
        %v1137 = vunpack.c.l.b16 %v1025
        %v1138 = vunpack.c.l.b16 %v1026
        %v1139 = vunpack.c.l.b16 %v1027
        %v1140 = vunpack.c.l.b16 %v1028
        %v1141 = vunpack.c.l.b16 %v1029
        %v1142 = vpack.c.b16 %v1127, %v1126
        %v1143 = vpack.c.b16 %v1129, %v1128
        %v1144 = vpack.c.b16 %v1131, %v1130
        %v1145 = vpack.c.b16 %v1133, %v1132
        %v1146 = vpack.c.b16 %v1135, %v1134
        %v1147 = vpack.c.b16 %v1137, %v1136
        %v1148 = vpack.c.b16 %v1139, %v1138
        %v1149 = vpack.c.b16 %v1141, %v1140
        %1158 = vmatpush.bf16.msra.mxu0 %v1149
        %1159 = vmatpush.bf16.msra.mxu0 %v1148
        %1160 = vmatpush.bf16.msra.mxu0 %v1147
        %1161 = vmatpush.bf16.msra.mxu0 %v1146
        %1162 = vmatpush.bf16.msra.mxu0 %v1145
        %1163 = vmatpush.bf16.msra.mxu0 %v1144
        %1164 = vmatpush.bf16.msra.mxu0 %v1143
        %1165 = vmatpush.bf16.msra.mxu0 %v1142
        %1166 = vmatmul.bf16.gmra.mxu0 %v1013
        %v1167 = vpop.f32.mrf.mxu0
        %v1168 = vadd.f32 %v1106, %v1167
        %v1169 = vpop.f32.mrf.mxu0
        %v1170 = vadd.f32 %v1108, %v1169
        %1171 = vdwg.mxu0
        %v1172 = vpack.c.bf16 %v1012, %v1009
        %s1173 = scalar_lea.vmem %s694, 128
        %v1174 = vld [vmem:[%s1173] sm:$0xf]
        %v1175 = vld [vmem:[%s1173 + $0x4] sm:$0xf]
        %v1176 = vld [vmem:[%s1173 + $0x8] sm:$0xf]
        %v1177 = vld [vmem:[%s1173 + $0xc] sm:$0xf]
        %v1178 = vld [vmem:[%s1173 + $0x10] sm:$0xf]
        %v1179 = vld [vmem:[%s1173 + $0x14] sm:$0xf]
        %v1180 = vld [vmem:[%s1173 + $0x18] sm:$0xf]
        %v1181 = vld [vmem:[%s1173 + $0x1c] sm:$0xf]
        %v1182 = vld [vmem:[%s1173 + $0x20] sm:$0xf]
        %v1183 = vld [vmem:[%s1173 + $0x24] sm:$0xf]
        %v1184 = vld [vmem:[%s1173 + $0x28] sm:$0xf]
        %v1185 = vld [vmem:[%s1173 + $0x2c] sm:$0xf]
        %v1186 = vld [vmem:[%s1173 + $0x30] sm:$0xf]
        %v1187 = vld [vmem:[%s1173 + $0x34] sm:$0xf]
        %v1188 = vld [vmem:[%s1173 + $0x38] sm:$0xf]
        %v1189 = vld [vmem:[%s1173 + $0x3c] sm:$0xf]
        %v1206 = vunpack.c.l.b16 %v1174
        %v1207 = vunpack.c.l.b16 %v1175
        %v1208 = vunpack.c.l.b16 %v1176
        %v1209 = vunpack.c.l.b16 %v1177
        %v1210 = vunpack.c.l.b16 %v1178
        %v1211 = vunpack.c.l.b16 %v1179
        %v1212 = vunpack.c.l.b16 %v1180
        %v1213 = vunpack.c.l.b16 %v1181
        %v1214 = vunpack.c.l.b16 %v1182
        %v1215 = vunpack.c.l.b16 %v1183
        %v1216 = vunpack.c.l.b16 %v1184
        %v1217 = vunpack.c.l.b16 %v1185
        %v1218 = vunpack.c.l.b16 %v1186
        %v1219 = vunpack.c.l.b16 %v1187
        %v1220 = vunpack.c.l.b16 %v1188
        %v1221 = vunpack.c.l.b16 %v1189
        %v1222 = vpack.c.b16 %v1207, %v1206
        %v1223 = vpack.c.b16 %v1209, %v1208
        %v1224 = vpack.c.b16 %v1211, %v1210
        %v1225 = vpack.c.b16 %v1213, %v1212
        %v1226 = vpack.c.b16 %v1215, %v1214
        %v1227 = vpack.c.b16 %v1217, %v1216
        %v1228 = vpack.c.b16 %v1219, %v1218
        %v1229 = vpack.c.b16 %v1221, %v1220
        %1238 = vmatpush.bf16.msra.mxu0 %v1229
        %1239 = vmatpush.bf16.msra.mxu0 %v1228
        %1240 = vmatpush.bf16.msra.mxu0 %v1227
        %1241 = vmatpush.bf16.msra.mxu0 %v1226
        %1242 = vmatpush.bf16.msra.mxu0 %v1225
        %1243 = vmatpush.bf16.msra.mxu0 %v1224
        %1244 = vmatpush.bf16.msra.mxu0 %v1223
        %1245 = vmatpush.bf16.msra.mxu0 %v1222
        %1246 = vmatmul.bf16.gmra.mxu0 %v1172
        %v1247 = vpop.f32.mrf.mxu0
        %v1248 = vadd.f32 0.0, %v1247
        %v1249 = vpop.f32.mrf.mxu0
        %v1250 = vadd.f32 0.0, %v1249
        %1251 = vdwg.mxu0
        %v1252 = vadd.f32 %v1168, %v1248
        %v1253 = vadd.f32 %v1170, %v1250
        %v1254 = vld [vmem:[%s697] sm:$0x1]
        %v1256 = vperm.slane %v1254, 0
        %v1258 = vadd.f32 %v1252, %v1256
        %v1259 = vadd.f32 %v1253, %v1256
        %v1260 = vmax.f32 %v1258, 0.0
        %v1261 = vmax.f32 %v1259, 0.0
        %v1264 = vrot.slane %v1260, 7
        %v1265 = vrot.slane %v1261, 7
        %v1266 = vsel %vm999, %v1264, %v1265
        %v1269 = vsel %vm999, 0.0, %v1264
        %v1270 = vrot.slane %v1260, 1
        %v1271 = vrot.slane %v1261, 1
        %v1272 = vsel %vm1006, %v1270, %v1271
        %v1275 = vsel %vm1006, %v1271, 0.0
        %v1276 = vpack.c.bf16 %v1266, %v1269
        %v1277 = vld [vmem:[%s585] sm:$0xf]
        %v1278 = vld [vmem:[%s585 + $0x4] sm:$0xf]
        %v1279 = vld [vmem:[%s585 + $0x8] sm:$0xf]
        %v1280 = vld [vmem:[%s585 + $0xc] sm:$0xf]
        %v1281 = vld [vmem:[%s585 + $0x10] sm:$0xf]
        %v1282 = vld [vmem:[%s585 + $0x14] sm:$0xf]
        %v1283 = vld [vmem:[%s585 + $0x18] sm:$0xf]
        %v1284 = vld [vmem:[%s585 + $0x1c] sm:$0xf]
        %v1285 = vld [vmem:[%s585 + $0x20] sm:$0xf]
        %v1286 = vld [vmem:[%s585 + $0x24] sm:$0xf]
        %v1287 = vld [vmem:[%s585 + $0x28] sm:$0xf]
        %v1288 = vld [vmem:[%s585 + $0x2c] sm:$0xf]
        %v1289 = vld [vmem:[%s585 + $0x30] sm:$0xf]
        %v1290 = vld [vmem:[%s585 + $0x34] sm:$0xf]
        %v1291 = vld [vmem:[%s585 + $0x38] sm:$0xf]
        %v1292 = vld [vmem:[%s585 + $0x3c] sm:$0xf]
        %v1293 = vpack.c.bf16 %v1261, %v1260
        %s1294 = scalar_lea.vmem %s585, 64 [#allocation4]
        %v1295 = vld [vmem:[%s1294] sm:$0xf]
        %v1296 = vld [vmem:[%s1294 + $0x4] sm:$0xf]
        %v1297 = vld [vmem:[%s1294 + $0x8] sm:$0xf]
        %v1298 = vld [vmem:[%s1294 + $0xc] sm:$0xf]
        %v1299 = vld [vmem:[%s1294 + $0x10] sm:$0xf]
        %v1300 = vld [vmem:[%s1294 + $0x14] sm:$0xf]
        %v1301 = vld [vmem:[%s1294 + $0x18] sm:$0xf]
        %v1302 = vld [vmem:[%s1294 + $0x1c] sm:$0xf]
        %v1303 = vld [vmem:[%s1294 + $0x20] sm:$0xf]
        %v1304 = vld [vmem:[%s1294 + $0x24] sm:$0xf]
        %v1305 = vld [vmem:[%s1294 + $0x28] sm:$0xf]
        %v1306 = vld [vmem:[%s1294 + $0x2c] sm:$0xf]
        %v1307 = vld [vmem:[%s1294 + $0x30] sm:$0xf]
        %v1308 = vld [vmem:[%s1294 + $0x34] sm:$0xf]
        %v1309 = vld [vmem:[%s1294 + $0x38] sm:$0xf]
        %v1310 = vld [vmem:[%s1294 + $0x3c] sm:$0xf]
        %v1327 = vunpack.c.l.b16 %v1295
        %v1328 = vunpack.c.l.b16 %v1296
        %v1329 = vunpack.c.l.b16 %v1297
        %v1330 = vunpack.c.l.b16 %v1298
        %v1331 = vunpack.c.l.b16 %v1299
        %v1332 = vunpack.c.l.b16 %v1300
        %v1333 = vunpack.c.l.b16 %v1301
        %v1334 = vunpack.c.l.b16 %v1302
        %v1335 = vunpack.c.l.b16 %v1303
        %v1336 = vunpack.c.l.b16 %v1304
        %v1337 = vunpack.c.l.b16 %v1305
        %v1338 = vunpack.c.l.b16 %v1306
        %v1339 = vunpack.c.l.b16 %v1307
        %v1340 = vunpack.c.l.b16 %v1308
        %v1341 = vunpack.c.l.b16 %v1309
        %v1342 = vunpack.c.l.b16 %v1310
        %v1343 = vpack.c.b16 %v1328, %v1327
        %v1344 = vpack.c.b16 %v1330, %v1329
        %v1345 = vpack.c.b16 %v1332, %v1331
        %v1346 = vpack.c.b16 %v1334, %v1333
        %v1347 = vpack.c.b16 %v1336, %v1335
        %v1348 = vpack.c.b16 %v1338, %v1337
        %v1349 = vpack.c.b16 %v1340, %v1339
        %v1350 = vpack.c.b16 %v1342, %v1341
        %1359 = vmatpush.bf16.msra.mxu0 %v1350
        %1360 = vmatpush.bf16.msra.mxu0 %v1349
        %1361 = vmatpush.bf16.msra.mxu0 %v1348
        %1362 = vmatpush.bf16.msra.mxu0 %v1347
        %1363 = vmatpush.bf16.msra.mxu0 %v1346
        %1364 = vmatpush.bf16.msra.mxu0 %v1345
        %1365 = vmatpush.bf16.msra.mxu0 %v1344
        %1366 = vmatpush.bf16.msra.mxu0 %v1343
        %1367 = vmatmul.bf16.gmra.mxu0 %v1293
        %v1368 = vpop.f32.mrf.mxu0
        %v1369 = vadd.f32 0.0, %v1368
        %v1370 = vpop.f32.mrf.mxu0
        %v1371 = vadd.f32 0.0, %v1370
        %1372 = vdwg.mxu0
        %v1389 = vunpack.c.l.b16 %v1277
        %v1390 = vunpack.c.l.b16 %v1278
        %v1391 = vunpack.c.l.b16 %v1279
        %v1392 = vunpack.c.l.b16 %v1280
        %v1393 = vunpack.c.l.b16 %v1281
        %v1394 = vunpack.c.l.b16 %v1282
        %v1395 = vunpack.c.l.b16 %v1283
        %v1396 = vunpack.c.l.b16 %v1284
        %v1397 = vunpack.c.l.b16 %v1285
        %v1398 = vunpack.c.l.b16 %v1286
        %v1399 = vunpack.c.l.b16 %v1287
        %v1400 = vunpack.c.l.b16 %v1288
        %v1401 = vunpack.c.l.b16 %v1289
        %v1402 = vunpack.c.l.b16 %v1290
        %v1403 = vunpack.c.l.b16 %v1291
        %v1404 = vunpack.c.l.b16 %v1292
        %v1405 = vpack.c.b16 %v1390, %v1389
        %v1406 = vpack.c.b16 %v1392, %v1391
        %v1407 = vpack.c.b16 %v1394, %v1393
        %v1408 = vpack.c.b16 %v1396, %v1395
        %v1409 = vpack.c.b16 %v1398, %v1397
        %v1410 = vpack.c.b16 %v1400, %v1399
        %v1411 = vpack.c.b16 %v1402, %v1401
        %v1412 = vpack.c.b16 %v1404, %v1403
        %1421 = vmatpush.bf16.msra.mxu0 %v1412
        %1422 = vmatpush.bf16.msra.mxu0 %v1411
        %1423 = vmatpush.bf16.msra.mxu0 %v1410
        %1424 = vmatpush.bf16.msra.mxu0 %v1409
        %1425 = vmatpush.bf16.msra.mxu0 %v1408
        %1426 = vmatpush.bf16.msra.mxu0 %v1407
        %1427 = vmatpush.bf16.msra.mxu0 %v1406
        %1428 = vmatpush.bf16.msra.mxu0 %v1405
        %1429 = vmatmul.bf16.gmra.mxu0 %v1276
        %v1430 = vpop.f32.mrf.mxu0
        %v1431 = vadd.f32 %v1369, %v1430
        %v1432 = vpop.f32.mrf.mxu0
        %v1433 = vadd.f32 %v1371, %v1432
        %1434 = vdwg.mxu0
        %v1435 = vpack.c.bf16 %v1275, %v1272
        %s1436 = scalar_lea.vmem %s585, 128 [#allocation4]
        %v1437 = vld [vmem:[%s1436] sm:$0xf]
        %v1438 = vld [vmem:[%s1436 + $0x4] sm:$0xf]
        %v1439 = vld [vmem:[%s1436 + $0x8] sm:$0xf]
        %v1440 = vld [vmem:[%s1436 + $0xc] sm:$0xf]
        %v1441 = vld [vmem:[%s1436 + $0x10] sm:$0xf]
        %v1442 = vld [vmem:[%s1436 + $0x14] sm:$0xf]
        %v1443 = vld [vmem:[%s1436 + $0x18] sm:$0xf]
        %v1444 = vld [vmem:[%s1436 + $0x1c] sm:$0xf]
        %v1445 = vld [vmem:[%s1436 + $0x20] sm:$0xf]
        %v1446 = vld [vmem:[%s1436 + $0x24] sm:$0xf]
        %v1447 = vld [vmem:[%s1436 + $0x28] sm:$0xf]
        %v1448 = vld [vmem:[%s1436 + $0x2c] sm:$0xf]
        %v1449 = vld [vmem:[%s1436 + $0x30] sm:$0xf]
        %v1450 = vld [vmem:[%s1436 + $0x34] sm:$0xf]
        %v1451 = vld [vmem:[%s1436 + $0x38] sm:$0xf]
        %v1452 = vld [vmem:[%s1436 + $0x3c] sm:$0xf]
        %v1469 = vunpack.c.l.b16 %v1437
        %v1470 = vunpack.c.l.b16 %v1438
        %v1471 = vunpack.c.l.b16 %v1439
        %v1472 = vunpack.c.l.b16 %v1440
        %v1473 = vunpack.c.l.b16 %v1441
        %v1474 = vunpack.c.l.b16 %v1442
        %v1475 = vunpack.c.l.b16 %v1443
        %v1476 = vunpack.c.l.b16 %v1444
        %v1477 = vunpack.c.l.b16 %v1445
        %v1478 = vunpack.c.l.b16 %v1446
        %v1479 = vunpack.c.l.b16 %v1447
        %v1480 = vunpack.c.l.b16 %v1448
        %v1481 = vunpack.c.l.b16 %v1449
        %v1482 = vunpack.c.l.b16 %v1450
        %v1483 = vunpack.c.l.b16 %v1451
        %v1484 = vunpack.c.l.b16 %v1452
        %v1485 = vpack.c.b16 %v1470, %v1469
        %v1486 = vpack.c.b16 %v1472, %v1471
        %v1487 = vpack.c.b16 %v1474, %v1473
        %v1488 = vpack.c.b16 %v1476, %v1475
        %v1489 = vpack.c.b16 %v1478, %v1477
        %v1490 = vpack.c.b16 %v1480, %v1479
        %v1491 = vpack.c.b16 %v1482, %v1481
        %v1492 = vpack.c.b16 %v1484, %v1483
        %1501 = vmatpush.bf16.msra.mxu0 %v1492
        %1502 = vmatpush.bf16.msra.mxu0 %v1491
        %1503 = vmatpush.bf16.msra.mxu0 %v1490
        %1504 = vmatpush.bf16.msra.mxu0 %v1489
        %1505 = vmatpush.bf16.msra.mxu0 %v1488
        %1506 = vmatpush.bf16.msra.mxu0 %v1487
        %1507 = vmatpush.bf16.msra.mxu0 %v1486
        %1508 = vmatpush.bf16.msra.mxu0 %v1485
        %1509 = vmatmul.bf16.gmra.mxu0 %v1435
        %v1510 = vpop.f32.mrf.mxu0
        %v1511 = vadd.f32 0.0, %v1510
        %v1512 = vpop.f32.mrf.mxu0
        %v1513 = vadd.f32 0.0, %v1512
        %1514 = vdwg.mxu0
        %v1515 = vadd.f32 %v1431, %v1511
        %v1516 = vadd.f32 %v1433, %v1513
        %v1517 = vld [vmem:[%s700] sm:$0x1]
        %v1519 = vperm.slane %v1517, 0
        %v1521 = vadd.f32 %v1515, %v1519
        %v1522 = vadd.f32 %v1516, %v1519
        %v1523 = vadd.f32 %v1521, %v995
        %v1524 = vadd.f32 %v1522, %v996
        %v1525 = vmul.f32 %v1523, %v1523
        %v1526 = vmul.f32 %v1524, %v1524
        %v1527 = vld [vmem:[#allocation6] sm:$0xff]
        %v1528 = vld [vmem:[#allocation6 + $0x8] sm:$0xff]
        %v1529 = vld [vmem:[#allocation6 + $0x10] sm:$0xff]
        %v1530 = vld [vmem:[#allocation6 + $0x18] sm:$0xff]
        %v1531 = vld [vmem:[#allocation6 + $0x20] sm:$0xff]
        %v1532 = vld [vmem:[#allocation6 + $0x28] sm:$0xff]
        %v1533 = vld [vmem:[#allocation6 + $0x30] sm:$0xff]
        %v1534 = vld [vmem:[#allocation6 + $0x38] sm:$0xff]
        %v1535 = vld [vmem:[#allocation6 + $0x40] sm:$0xff]
        %v1536 = vld [vmem:[#allocation6 + $0x48] sm:$0xff]
        %v1537 = vld [vmem:[#allocation6 + $0x50] sm:$0xff]
        %v1538 = vld [vmem:[#allocation6 + $0x58] sm:$0xff]
        %v1539 = vld [vmem:[#allocation6 + $0x60] sm:$0xff]
        %v1540 = vld [vmem:[#allocation6 + $0x68] sm:$0xff]
        %v1541 = vld [vmem:[#allocation6 + $0x70] sm:$0xff]
        %v1542 = vld [vmem:[#allocation6 + $0x78] sm:$0xff]
        %1543 = vmatpush.msra.mxu0 %v1542
        %1544 = vmatpush.msra.mxu0 %v1541
        %1545 = vmatpush.msra.mxu0 %v1540
        %1546 = vmatpush.msra.mxu0 %v1539
        %1547 = vmatpush.msra.mxu0 %v1538
        %1548 = vmatpush.msra.mxu0 %v1537
        %1549 = vmatpush.msra.mxu0 %v1536
        %1550 = vmatpush.msra.mxu0 %v1535
        %1551 = vmatpush.msra.mxu0 %v1534
        %1552 = vmatpush.msra.mxu0 %v1533
        %1553 = vmatpush.msra.mxu0 %v1532
        %1554 = vmatpush.msra.mxu0 %v1531
        %1555 = vmatpush.msra.mxu0 %v1530
        %1556 = vmatpush.msra.mxu0 %v1529
        %1557 = vmatpush.msra.mxu0 %v1528
        %1558 = vmatpush.msra.mxu0 %v1527
        %1559 = vmatmul.f32.gmra.mxu0 %v1523
        %v1560 = vpop.f32.mrf.mxu0
        %v1561 = vadd.f32 0.0, %v1560
        %1562 = vmatmul.f32.gmra.mxu0 %v1524
        %v1563 = vpop.f32.mrf.mxu0
        %v1564 = vadd.f32 0.0, %v1563
        %1565 = vmatmul.f32.gmra.mxu0 %v1525
        %v1566 = vpop.f32.mrf.mxu0
        %v1567 = vadd.f32 0.0, %v1566
        %1568 = vmatmul.f32.gmra.mxu0 %v1526
        %v1569 = vpop.f32.mrf.mxu0
        %v1570 = vadd.f32 0.0, %v1569
        %1571 = vdwg.mxu0
        %v1572 = vmul.f32 %v1561, %v1561
        %v1573 = vmul.f32 %v1564, %v1564
        %v1574 = vsub.f32 %v1567, %v1572
        %v1575 = vsub.f32 %v1570, %v1573
        %v1576 = vmax.f32 %v1574, 0.0
        %v1577 = vmax.f32 %v1575, 0.0
        %v1578 = vsub.f32 %v1523, %v1561
        %v1579 = vsub.f32 %v1524, %v1564
        %v1580 = vadd.f32 %v1576, 1e-05
        %v1581 = vadd.f32 %v1577, 1e-05
        %v1582 = vrsqrt.pop %v1580
        %v1583 = vmul.f32 %v1582, %v1580
        %v1584 = vmul.f32 %v1583, %v1582
        %v1585 = vmul.f32 0.5, %v1584
        %v1586 = vsub.f32 1.5, %v1585
        %v1587 = vmul.f32 %v1582, %v1586
        %vm1588 = vweird.f32 %v1580
        %vm1589 = vweird.f32 %v1582
        %vm1590 = vmor %vm1588, %vm1589
        %v1591 = vsel %vm1590, %v1582, %v1587
        %v1592 = vrsqrt.pop %v1581
        %v1593 = vmul.f32 %v1592, %v1581
        %v1594 = vmul.f32 %v1593, %v1592
        %v1595 = vmul.f32 0.5, %v1594
        %v1596 = vsub.f32 1.5, %v1595
        %v1597 = vmul.f32 %v1592, %v1596
        %vm1598 = vweird.f32 %v1581
        %vm1599 = vweird.f32 %v1592
        %vm1600 = vmor %vm1598, %vm1599
        %v1601 = vsel %vm1600, %v1592, %v1597
        %v1602 = vmul.f32 %v1578, %v1591
        %v1603 = vmul.f32 %v1579, %v1601
        %v1604 = vld [vmem:[%s703] sm:$0x1]
        %v1606 = vperm.slane %v1604, 0
        %v1608 = vmul.f32 %v1602, %v1606
        %v1609 = vmul.f32 %v1603, %v1606
        %v1610 = vld [vmem:[%s706] sm:$0x1]
        %v1612 = vperm.slane %v1610, 0
        %v1614 = vadd.f32 %v1608, %v1612
        %v1615 = vadd.f32 %v1609, %v1612
        %v1616 = vpack.c.bf16 %v1615, %v1614
        %v1617 = vld [vmem:[%s711] sm:$0xff]
        %v1618 = vld [vmem:[%s711 + $0x8] sm:$0xff]
        %v1619 = vld [vmem:[%s711 + $0x10] sm:$0xff]
        %v1620 = vld [vmem:[%s711 + $0x18] sm:$0xff]
        %v1621 = vld [vmem:[%s711 + $0x20] sm:$0xff]
        %v1622 = vld [vmem:[%s711 + $0x28] sm:$0xff]
        %v1623 = vld [vmem:[%s711 + $0x30] sm:$0xff]
        %v1624 = vld [vmem:[%s711 + $0x38] sm:$0xff]
        %v1625 = vld [vmem:[%s711 + $0x40] sm:$0xff]
        %v1626 = vld [vmem:[%s711 + $0x48] sm:$0xff]
        %v1627 = vld [vmem:[%s711 + $0x50] sm:$0xff]
        %v1628 = vld [vmem:[%s711 + $0x58] sm:$0xff]
        %v1629 = vld [vmem:[%s711 + $0x60] sm:$0xff]
        %v1630 = vld [vmem:[%s711 + $0x68] sm:$0xff]
        %v1631 = vld [vmem:[%s711 + $0x70] sm:$0xff]
        %v1632 = vld [vmem:[%s711 + $0x78] sm:$0xff]
        %v1633 = vld [vmem:[%s711 + $0x80] sm:$0xff]
        %v1634 = vld [vmem:[%s711 + $0x88] sm:$0xff]
        %v1635 = vld [vmem:[%s711 + $0x90] sm:$0xff]
        %v1636 = vld [vmem:[%s711 + $0x98] sm:$0xff]
        %v1637 = vld [vmem:[%s711 + $0xa0] sm:$0xff]
        %v1638 = vld [vmem:[%s711 + $0xa8] sm:$0xff]
        %v1639 = vld [vmem:[%s711 + $0xb0] sm:$0xff]
        %v1640 = vld [vmem:[%s711 + $0xb8] sm:$0xff]
        %v1641 = vld [vmem:[%s711 + $0xc0] sm:$0xff]
        %v1642 = vld [vmem:[%s711 + $0xc8] sm:$0xff]
        %v1643 = vld [vmem:[%s711 + $0xd0] sm:$0xff]
        %v1644 = vld [vmem:[%s711 + $0xd8] sm:$0xff]
        %v1645 = vld [vmem:[%s711 + $0xe0] sm:$0xff]
        %v1646 = vld [vmem:[%s711 + $0xe8] sm:$0xff]
        %v1647 = vld [vmem:[%s711 + $0xf0] sm:$0xff]
        %v1648 = vld [vmem:[%s711 + $0xf8] sm:$0xff]
        %v1649 = vld [vmem:[%s715] sm:$0xf]
        %v1651 = vperm.slane %v1649, 0
        %v1652 = vperm.slane %v1649, 1
        %v1653 = vperm.slane %v1649, 2
        %v1654 = vperm.slane %v1649, 3
        %v1691 = vunpack.c.l.b16 %v1617
        %v1692 = vunpack.c.h.b16 %v1617
        %v1693 = vunpack.c.l.b16 %v1618
        %v1694 = vunpack.c.h.b16 %v1618
        %v1695 = vunpack.c.l.b16 %v1619
        %v1696 = vunpack.c.h.b16 %v1619
        %v1697 = vunpack.c.l.b16 %v1620
        %v1698 = vunpack.c.h.b16 %v1620
        %v1699 = vunpack.c.l.b16 %v1621
        %v1700 = vunpack.c.h.b16 %v1621
        %v1701 = vunpack.c.l.b16 %v1622
        %v1702 = vunpack.c.h.b16 %v1622
        %v1703 = vunpack.c.l.b16 %v1623
        %v1704 = vunpack.c.h.b16 %v1623
        %v1705 = vunpack.c.l.b16 %v1624
        %v1706 = vunpack.c.h.b16 %v1624
        %v1707 = vunpack.c.l.b16 %v1625
        %v1708 = vunpack.c.h.b16 %v1625
        %v1709 = vunpack.c.l.b16 %v1626
        %v1710 = vunpack.c.h.b16 %v1626
        %v1711 = vunpack.c.l.b16 %v1627
        %v1712 = vunpack.c.h.b16 %v1627
        %v1713 = vunpack.c.l.b16 %v1628
        %v1714 = vunpack.c.h.b16 %v1628
        %v1715 = vunpack.c.l.b16 %v1629
        %v1716 = vunpack.c.h.b16 %v1629
        %v1717 = vunpack.c.l.b16 %v1630
        %v1718 = vunpack.c.h.b16 %v1630
        %v1719 = vunpack.c.l.b16 %v1631
        %v1720 = vunpack.c.h.b16 %v1631
        %v1721 = vunpack.c.l.b16 %v1632
        %v1722 = vunpack.c.h.b16 %v1632
        %v1723 = vunpack.c.l.b16 %v1633
        %v1724 = vunpack.c.h.b16 %v1633
        %v1725 = vunpack.c.l.b16 %v1634
        %v1726 = vunpack.c.h.b16 %v1634
        %v1727 = vunpack.c.l.b16 %v1635
        %v1728 = vunpack.c.h.b16 %v1635
        %v1729 = vunpack.c.l.b16 %v1636
        %v1730 = vunpack.c.h.b16 %v1636
        %v1731 = vunpack.c.l.b16 %v1637
        %v1732 = vunpack.c.h.b16 %v1637
        %v1733 = vunpack.c.l.b16 %v1638
        %v1734 = vunpack.c.h.b16 %v1638
        %v1735 = vunpack.c.l.b16 %v1639
        %v1736 = vunpack.c.h.b16 %v1639
        %v1737 = vunpack.c.l.b16 %v1640
        %v1738 = vunpack.c.h.b16 %v1640
        %v1739 = vunpack.c.l.b16 %v1641
        %v1740 = vunpack.c.h.b16 %v1641
        %v1741 = vunpack.c.l.b16 %v1642
        %v1742 = vunpack.c.h.b16 %v1642
        %v1743 = vunpack.c.l.b16 %v1643
        %v1744 = vunpack.c.h.b16 %v1643
        %v1745 = vunpack.c.l.b16 %v1644
        %v1746 = vunpack.c.h.b16 %v1644
        %v1747 = vunpack.c.l.b16 %v1645
        %v1748 = vunpack.c.h.b16 %v1645
        %v1749 = vunpack.c.l.b16 %v1646
        %v1750 = vunpack.c.h.b16 %v1646
        %v1751 = vunpack.c.l.b16 %v1647
        %v1752 = vunpack.c.h.b16 %v1647
        %v1753 = vunpack.c.l.b16 %v1648
        %v1754 = vunpack.c.h.b16 %v1648
        %v1755 = vpack.c.b16 %v1695, %v1691
        %v1756 = vpack.c.b16 %v1696, %v1692
        %v1757 = vpack.c.b16 %v1697, %v1693
        %v1758 = vpack.c.b16 %v1698, %v1694
        %v1759 = vpack.c.b16 %v1703, %v1699
        %v1760 = vpack.c.b16 %v1704, %v1700
        %v1761 = vpack.c.b16 %v1705, %v1701
        %v1762 = vpack.c.b16 %v1706, %v1702
        %v1763 = vpack.c.b16 %v1711, %v1707
        %v1764 = vpack.c.b16 %v1712, %v1708
        %v1765 = vpack.c.b16 %v1713, %v1709
        %v1766 = vpack.c.b16 %v1714, %v1710
        %v1767 = vpack.c.b16 %v1719, %v1715
        %v1768 = vpack.c.b16 %v1720, %v1716
        %v1769 = vpack.c.b16 %v1721, %v1717
        %v1770 = vpack.c.b16 %v1722, %v1718
        %v1771 = vpack.c.b16 %v1727, %v1723
        %v1772 = vpack.c.b16 %v1728, %v1724
        %v1773 = vpack.c.b16 %v1729, %v1725
        %v1774 = vpack.c.b16 %v1730, %v1726
        %v1775 = vpack.c.b16 %v1735, %v1731
        %v1776 = vpack.c.b16 %v1736, %v1732
        %v1777 = vpack.c.b16 %v1737, %v1733
        %v1778 = vpack.c.b16 %v1738, %v1734
        %v1779 = vpack.c.b16 %v1743, %v1739
        %v1780 = vpack.c.b16 %v1744, %v1740
        %v1781 = vpack.c.b16 %v1745, %v1741
        %v1782 = vpack.c.b16 %v1746, %v1742
        %v1783 = vpack.c.b16 %v1751, %v1747
        %v1784 = vpack.c.b16 %v1752, %v1748
        %v1785 = vpack.c.b16 %v1753, %v1749
        %v1786 = vpack.c.b16 %v1754, %v1750
        %1819 = vmatpush.bf16.msra.mxu0 %v1783
        %1820 = vmatpush.bf16.msra.mxu0 %v1779
        %1821 = vmatpush.bf16.msra.mxu0 %v1775
        %1822 = vmatpush.bf16.msra.mxu0 %v1771
        %1823 = vmatpush.bf16.msra.mxu0 %v1767
        %1824 = vmatpush.bf16.msra.mxu0 %v1763
        %1825 = vmatpush.bf16.msra.mxu0 %v1759
        %1826 = vmatpush.bf16.msra.mxu0 %v1755
        %1827 = vmatmul.bf16.gmra.mxu0 %v1616
        %v1828 = vpop.f32.mrf.mxu0
        %v1829 = vadd.f32 %v1651, %v1828
        %v1830 = vpop.f32.mrf.mxu0
        %v1831 = vadd.f32 %v1651, %v1830
        %1832 = vdwg.mxu0
        %1833 = vmatpush.bf16.msra.mxu0 %v1784
        %1834 = vmatpush.bf16.msra.mxu0 %v1780
        %1835 = vmatpush.bf16.msra.mxu0 %v1776
        %1836 = vmatpush.bf16.msra.mxu0 %v1772
        %1837 = vmatpush.bf16.msra.mxu0 %v1768
        %1838 = vmatpush.bf16.msra.mxu0 %v1764
        %1839 = vmatpush.bf16.msra.mxu0 %v1760
        %1840 = vmatpush.bf16.msra.mxu0 %v1756
        %1841 = vmatmul.bf16.gmra.mxu0 %v1616
        %v1842 = vpop.f32.mrf.mxu0
        %v1843 = vadd.f32 %v1652, %v1842
        %v1844 = vpop.f32.mrf.mxu0
        %v1845 = vadd.f32 %v1652, %v1844
        %1846 = vdwg.mxu0
        %1847 = vmatpush.bf16.msra.mxu0 %v1785
        %1848 = vmatpush.bf16.msra.mxu0 %v1781
        %1849 = vmatpush.bf16.msra.mxu0 %v1777
        %1850 = vmatpush.bf16.msra.mxu0 %v1773
        %1851 = vmatpush.bf16.msra.mxu0 %v1769
        %1852 = vmatpush.bf16.msra.mxu0 %v1765
        %1853 = vmatpush.bf16.msra.mxu0 %v1761
        %1854 = vmatpush.bf16.msra.mxu0 %v1757
        %1855 = vmatmul.bf16.gmra.mxu0 %v1616
        %v1856 = vpop.f32.mrf.mxu0
        %v1857 = vadd.f32 %v1653, %v1856
        %v1858 = vpop.f32.mrf.mxu0
        %v1859 = vadd.f32 %v1653, %v1858
        %1860 = vdwg.mxu0
        %1861 = vmatpush.bf16.msra.mxu0 %v1786
        %1862 = vmatpush.bf16.msra.mxu0 %v1782
        %1863 = vmatpush.bf16.msra.mxu0 %v1778
        %1864 = vmatpush.bf16.msra.mxu0 %v1774
        %1865 = vmatpush.bf16.msra.mxu0 %v1770
        %1866 = vmatpush.bf16.msra.mxu0 %v1766
        %1867 = vmatpush.bf16.msra.mxu0 %v1762
        %1868 = vmatpush.bf16.msra.mxu0 %v1758
        %1869 = vmatmul.bf16.gmra.mxu0 %v1616
        %v1870 = vpop.f32.mrf.mxu0
        %v1871 = vadd.f32 %v1654, %v1870
        %v1872 = vpop.f32.mrf.mxu0
        %v1873 = vadd.f32 %v1654, %v1872
        %1874 = vdwg.mxu0
        %v1875 = vmul.f32 %v1829, %v1829
        %v1876 = vmul.f32 %v1843, %v1843
        %v1877 = vmul.f32 %v1857, %v1857
        %v1878 = vmul.f32 %v1871, %v1871
        %v1879 = vmul.f32 %v1831, %v1831
        %v1880 = vmul.f32 %v1845, %v1845
        %v1881 = vmul.f32 %v1859, %v1859
        %v1882 = vmul.f32 %v1873, %v1873
        %v1883 = vmul.f32 %v1829, %v1875
        %v1884 = vmul.f32 %v1843, %v1876
        %v1885 = vmul.f32 %v1857, %v1877
        %v1886 = vmul.f32 %v1871, %v1878
        %v1887 = vmul.f32 %v1831, %v1879
        %v1888 = vmul.f32 %v1845, %v1880
        %v1889 = vmul.f32 %v1859, %v1881
        %v1890 = vmul.f32 %v1873, %v1882
        %v1891 = vmul.f32 %v1883, 0.044715
        %v1892 = vmul.f32 %v1884, 0.044715
        %v1893 = vmul.f32 %v1885, 0.044715
        %v1894 = vmul.f32 %v1886, 0.044715
        %v1895 = vmul.f32 %v1887, 0.044715
        %v1896 = vmul.f32 %v1888, 0.044715
        %v1897 = vmul.f32 %v1889, 0.044715
        %v1898 = vmul.f32 %v1890, 0.044715
        %v1899 = vadd.f32 %v1829, %v1891
        %v1900 = vadd.f32 %v1843, %v1892
        %v1901 = vadd.f32 %v1857, %v1893
        %v1902 = vadd.f32 %v1871, %v1894
        %v1903 = vadd.f32 %v1831, %v1895
        %v1904 = vadd.f32 %v1845, %v1896
        %v1905 = vadd.f32 %v1859, %v1897
        %v1906 = vadd.f32 %v1873, %v1898
        %v1907 = vmul.f32 %v1899, 0.7978846
        %v1908 = vmul.f32 %v1900, 0.7978846
        %v1909 = vmul.f32 %v1901, 0.7978846
        %v1910 = vmul.f32 %v1902, 0.7978846
        %v1911 = vmul.f32 %v1903, 0.7978846
        %v1912 = vmul.f32 %v1904, 0.7978846
        %v1913 = vmul.f32 %v1905, 0.7978846
        %v1914 = vmul.f32 %v1906, 0.7978846
        %v1915 = vtanh.pop %v1907
        %v1916 = vtanh.pop %v1908
        %v1917 = vtanh.pop %v1909
        %v1918 = vtanh.pop %v1910
        %v1919 = vtanh.pop %v1911
        %v1920 = vtanh.pop %v1912
        %v1921 = vtanh.pop %v1913
        %v1922 = vtanh.pop %v1914
        %v1923 = vadd.f32 %v1915, 1.0
        %v1924 = vadd.f32 %v1916, 1.0
        %v1925 = vadd.f32 %v1917, 1.0
        %v1926 = vadd.f32 %v1918, 1.0
        %v1927 = vadd.f32 %v1919, 1.0
        %v1928 = vadd.f32 %v1920, 1.0
        %v1929 = vadd.f32 %v1921, 1.0
        %v1930 = vadd.f32 %v1922, 1.0
        %v1931 = vmul.f32 %v1923, 0.5
        %v1932 = vmul.f32 %v1924, 0.5
        %v1933 = vmul.f32 %v1925, 0.5
        %v1934 = vmul.f32 %v1926, 0.5
        %v1935 = vmul.f32 %v1927, 0.5
        %v1936 = vmul.f32 %v1928, 0.5
        %v1937 = vmul.f32 %v1929, 0.5
        %v1938 = vmul.f32 %v1930, 0.5
        %v1939 = vmul.f32 %v1829, %v1931
        %v1940 = vmul.f32 %v1843, %v1932
        %v1941 = vmul.f32 %v1857, %v1933
        %v1942 = vmul.f32 %v1871, %v1934
        %v1943 = vmul.f32 %v1831, %v1935
        %v1944 = vmul.f32 %v1845, %v1936
        %v1945 = vmul.f32 %v1859, %v1937
        %v1946 = vmul.f32 %v1873, %v1938
        %v1947 = vpack.c.bf16 %v1943, %v1939
        %v1948 = vpack.c.bf16 %v1944, %v1940
        %v1949 = vpack.c.bf16 %v1945, %v1941
        %v1950 = vpack.c.bf16 %v1946, %v1942
        %v1951 = vld [vmem:[%s600] sm:$0xf]
        %v1952 = vld [vmem:[%s600 + $0x4] sm:$0xf]
        %v1953 = vld [vmem:[%s600 + $0x8] sm:$0xf]
        %v1954 = vld [vmem:[%s600 + $0xc] sm:$0xf]
        %v1955 = vld [vmem:[%s600 + $0x10] sm:$0xf]
        %v1956 = vld [vmem:[%s600 + $0x14] sm:$0xf]
        %v1957 = vld [vmem:[%s600 + $0x18] sm:$0xf]
        %v1958 = vld [vmem:[%s600 + $0x1c] sm:$0xf]
        %v1959 = vld [vmem:[%s600 + $0x20] sm:$0xf]
        %v1960 = vld [vmem:[%s600 + $0x24] sm:$0xf]
        %v1961 = vld [vmem:[%s600 + $0x28] sm:$0xf]
        %v1962 = vld [vmem:[%s600 + $0x2c] sm:$0xf]
        %v1963 = vld [vmem:[%s600 + $0x30] sm:$0xf]
        %v1964 = vld [vmem:[%s600 + $0x34] sm:$0xf]
        %v1965 = vld [vmem:[%s600 + $0x38] sm:$0xf]
        %v1966 = vld [vmem:[%s600 + $0x3c] sm:$0xf]
        %v1967 = vld [vmem:[%s600 + $0x40] sm:$0xf]
        %v1968 = vld [vmem:[%s600 + $0x44] sm:$0xf]
        %v1969 = vld [vmem:[%s600 + $0x48] sm:$0xf]
        %v1970 = vld [vmem:[%s600 + $0x4c] sm:$0xf]
        %v1971 = vld [vmem:[%s600 + $0x50] sm:$0xf]
        %v1972 = vld [vmem:[%s600 + $0x54] sm:$0xf]
        %v1973 = vld [vmem:[%s600 + $0x58] sm:$0xf]
        %v1974 = vld [vmem:[%s600 + $0x5c] sm:$0xf]
        %v1975 = vld [vmem:[%s600 + $0x60] sm:$0xf]
        %v1976 = vld [vmem:[%s600 + $0x64] sm:$0xf]
        %v1977 = vld [vmem:[%s600 + $0x68] sm:$0xf]
        %v1978 = vld [vmem:[%s600 + $0x6c] sm:$0xf]
        %v1979 = vld [vmem:[%s600 + $0x70] sm:$0xf]
        %v1980 = vld [vmem:[%s600 + $0x74] sm:$0xf]
        %v1981 = vld [vmem:[%s600 + $0x78] sm:$0xf]
        %v1982 = vld [vmem:[%s600 + $0x7c] sm:$0xf]
        %v1983 = vld [vmem:[%s600 + $0x80] sm:$0xf]
        %v1984 = vld [vmem:[%s600 + $0x84] sm:$0xf]
        %v1985 = vld [vmem:[%s600 + $0x88] sm:$0xf]
        %v1986 = vld [vmem:[%s600 + $0x8c] sm:$0xf]
        %v1987 = vld [vmem:[%s600 + $0x90] sm:$0xf]
        %v1988 = vld [vmem:[%s600 + $0x94] sm:$0xf]
        %v1989 = vld [vmem:[%s600 + $0x98] sm:$0xf]
        %v1990 = vld [vmem:[%s600 + $0x9c] sm:$0xf]
        %v1991 = vld [vmem:[%s600 + $0xa0] sm:$0xf]
        %v1992 = vld [vmem:[%s600 + $0xa4] sm:$0xf]
        %v1993 = vld [vmem:[%s600 + $0xa8] sm:$0xf]
        %v1994 = vld [vmem:[%s600 + $0xac] sm:$0xf]
        %v1995 = vld [vmem:[%s600 + $0xb0] sm:$0xf]
        %v1996 = vld [vmem:[%s600 + $0xb4] sm:$0xf]
        %v1997 = vld [vmem:[%s600 + $0xb8] sm:$0xf]
        %v1998 = vld [vmem:[%s600 + $0xbc] sm:$0xf]
        %v1999 = vld [vmem:[%s600 + $0xc0] sm:$0xf]
        %v2000 = vld [vmem:[%s600 + $0xc4] sm:$0xf]
        %v2001 = vld [vmem:[%s600 + $0xc8] sm:$0xf]
        %v2002 = vld [vmem:[%s600 + $0xcc] sm:$0xf]
        %v2003 = vld [vmem:[%s600 + $0xd0] sm:$0xf]
        %v2004 = vld [vmem:[%s600 + $0xd4] sm:$0xf]
        %v2005 = vld [vmem:[%s600 + $0xd8] sm:$0xf]
        %v2006 = vld [vmem:[%s600 + $0xdc] sm:$0xf]
        %v2007 = vld [vmem:[%s600 + $0xe0] sm:$0xf]
        %v2008 = vld [vmem:[%s600 + $0xe4] sm:$0xf]
        %v2009 = vld [vmem:[%s600 + $0xe8] sm:$0xf]
        %v2010 = vld [vmem:[%s600 + $0xec] sm:$0xf]
        %v2011 = vld [vmem:[%s600 + $0xf0] sm:$0xf]
        %v2012 = vld [vmem:[%s600 + $0xf4] sm:$0xf]
        %v2013 = vld [vmem:[%s600 + $0xf8] sm:$0xf]
        %v2014 = vld [vmem:[%s600 + $0xfc] sm:$0xf]
        %v2079 = vunpack.c.l.b16 %v1951
        %v2080 = vunpack.c.l.b16 %v1952
        %v2081 = vunpack.c.l.b16 %v1953
        %v2082 = vunpack.c.l.b16 %v1954
        %v2083 = vunpack.c.l.b16 %v1955
        %v2084 = vunpack.c.l.b16 %v1956
        %v2085 = vunpack.c.l.b16 %v1957
        %v2086 = vunpack.c.l.b16 %v1958
        %v2087 = vunpack.c.l.b16 %v1959
        %v2088 = vunpack.c.l.b16 %v1960
        %v2089 = vunpack.c.l.b16 %v1961
        %v2090 = vunpack.c.l.b16 %v1962
        %v2091 = vunpack.c.l.b16 %v1963
        %v2092 = vunpack.c.l.b16 %v1964
        %v2093 = vunpack.c.l.b16 %v1965
        %v2094 = vunpack.c.l.b16 %v1966
        %v2095 = vunpack.c.l.b16 %v1967
        %v2096 = vunpack.c.l.b16 %v1968
        %v2097 = vunpack.c.l.b16 %v1969
        %v2098 = vunpack.c.l.b16 %v1970
        %v2099 = vunpack.c.l.b16 %v1971
        %v2100 = vunpack.c.l.b16 %v1972
        %v2101 = vunpack.c.l.b16 %v1973
        %v2102 = vunpack.c.l.b16 %v1974
        %v2103 = vunpack.c.l.b16 %v1975
        %v2104 = vunpack.c.l.b16 %v1976
        %v2105 = vunpack.c.l.b16 %v1977
        %v2106 = vunpack.c.l.b16 %v1978
        %v2107 = vunpack.c.l.b16 %v1979
        %v2108 = vunpack.c.l.b16 %v1980
        %v2109 = vunpack.c.l.b16 %v1981
        %v2110 = vunpack.c.l.b16 %v1982
        %v2111 = vunpack.c.l.b16 %v1983
        %v2112 = vunpack.c.l.b16 %v1984
        %v2113 = vunpack.c.l.b16 %v1985
        %v2114 = vunpack.c.l.b16 %v1986
        %v2115 = vunpack.c.l.b16 %v1987
        %v2116 = vunpack.c.l.b16 %v1988
        %v2117 = vunpack.c.l.b16 %v1989
        %v2118 = vunpack.c.l.b16 %v1990
        %v2119 = vunpack.c.l.b16 %v1991
        %v2120 = vunpack.c.l.b16 %v1992
        %v2121 = vunpack.c.l.b16 %v1993
        %v2122 = vunpack.c.l.b16 %v1994
        %v2123 = vunpack.c.l.b16 %v1995
        %v2124 = vunpack.c.l.b16 %v1996
        %v2125 = vunpack.c.l.b16 %v1997
        %v2126 = vunpack.c.l.b16 %v1998
        %v2127 = vunpack.c.l.b16 %v1999
        %v2128 = vunpack.c.l.b16 %v2000
        %v2129 = vunpack.c.l.b16 %v2001
        %v2130 = vunpack.c.l.b16 %v2002
        %v2131 = vunpack.c.l.b16 %v2003
        %v2132 = vunpack.c.l.b16 %v2004
        %v2133 = vunpack.c.l.b16 %v2005
        %v2134 = vunpack.c.l.b16 %v2006
        %v2135 = vunpack.c.l.b16 %v2007
        %v2136 = vunpack.c.l.b16 %v2008
        %v2137 = vunpack.c.l.b16 %v2009
        %v2138 = vunpack.c.l.b16 %v2010
        %v2139 = vunpack.c.l.b16 %v2011
        %v2140 = vunpack.c.l.b16 %v2012
        %v2141 = vunpack.c.l.b16 %v2013
        %v2142 = vunpack.c.l.b16 %v2014
        %v2143 = vpack.c.b16 %v2080, %v2079
        %v2144 = vpack.c.b16 %v2082, %v2081
        %v2145 = vpack.c.b16 %v2084, %v2083
        %v2146 = vpack.c.b16 %v2086, %v2085
        %v2147 = vpack.c.b16 %v2088, %v2087
        %v2148 = vpack.c.b16 %v2090, %v2089
        %v2149 = vpack.c.b16 %v2092, %v2091
        %v2150 = vpack.c.b16 %v2094, %v2093
        %v2151 = vpack.c.b16 %v2096, %v2095
        %v2152 = vpack.c.b16 %v2098, %v2097
        %v2153 = vpack.c.b16 %v2100, %v2099
        %v2154 = vpack.c.b16 %v2102, %v2101
        %v2155 = vpack.c.b16 %v2104, %v2103
        %v2156 = vpack.c.b16 %v2106, %v2105
        %v2157 = vpack.c.b16 %v2108, %v2107
        %v2158 = vpack.c.b16 %v2110, %v2109
        %v2159 = vpack.c.b16 %v2112, %v2111
        %v2160 = vpack.c.b16 %v2114, %v2113
        %v2161 = vpack.c.b16 %v2116, %v2115
        %v2162 = vpack.c.b16 %v2118, %v2117
        %v2163 = vpack.c.b16 %v2120, %v2119
        %v2164 = vpack.c.b16 %v2122, %v2121
        %v2165 = vpack.c.b16 %v2124, %v2123
        %v2166 = vpack.c.b16 %v2126, %v2125
        %v2167 = vpack.c.b16 %v2128, %v2127
        %v2168 = vpack.c.b16 %v2130, %v2129
        %v2169 = vpack.c.b16 %v2132, %v2131
        %v2170 = vpack.c.b16 %v2134, %v2133
        %v2171 = vpack.c.b16 %v2136, %v2135
        %v2172 = vpack.c.b16 %v2138, %v2137
        %v2173 = vpack.c.b16 %v2140, %v2139
        %v2174 = vpack.c.b16 %v2142, %v2141
        %2207 = vmatpush.bf16.msra.mxu0 %v2150
        %2208 = vmatpush.bf16.msra.mxu0 %v2149
        %2209 = vmatpush.bf16.msra.mxu0 %v2148
        %2210 = vmatpush.bf16.msra.mxu0 %v2147
        %2211 = vmatpush.bf16.msra.mxu0 %v2146
        %2212 = vmatpush.bf16.msra.mxu0 %v2145
        %2213 = vmatpush.bf16.msra.mxu0 %v2144
        %2214 = vmatpush.bf16.msra.mxu0 %v2143
        %2215 = vmatmul.bf16.gmra.mxu0 %v1947
        %v2216 = vpop.f32.mrf.mxu0
        %v2217 = vadd.f32 0.0, %v2216
        %v2218 = vpop.f32.mrf.mxu0
        %v2219 = vadd.f32 0.0, %v2218
        %2220 = vdwg.mxu0
        %2221 = vmatpush.bf16.msra.mxu0 %v2158
        %2222 = vmatpush.bf16.msra.mxu0 %v2157
        %2223 = vmatpush.bf16.msra.mxu0 %v2156
        %2224 = vmatpush.bf16.msra.mxu0 %v2155
        %2225 = vmatpush.bf16.msra.mxu0 %v2154
        %2226 = vmatpush.bf16.msra.mxu0 %v2153
        %2227 = vmatpush.bf16.msra.mxu0 %v2152
        %2228 = vmatpush.bf16.msra.mxu0 %v2151
        %2229 = vmatmul.bf16.gmra.mxu0 %v1948
        %v2230 = vpop.f32.mrf.mxu0
        %v2231 = vadd.f32 %v2217, %v2230
        %v2232 = vpop.f32.mrf.mxu0
        %v2233 = vadd.f32 %v2219, %v2232
        %2234 = vdwg.mxu0
        %2235 = vmatpush.bf16.msra.mxu0 %v2166
        %2236 = vmatpush.bf16.msra.mxu0 %v2165
        %2237 = vmatpush.bf16.msra.mxu0 %v2164
        %2238 = vmatpush.bf16.msra.mxu0 %v2163
        %2239 = vmatpush.bf16.msra.mxu0 %v2162
        %2240 = vmatpush.bf16.msra.mxu0 %v2161
        %2241 = vmatpush.bf16.msra.mxu0 %v2160
        %2242 = vmatpush.bf16.msra.mxu0 %v2159
        %2243 = vmatmul.bf16.gmra.mxu0 %v1949
        %v2244 = vpop.f32.mrf.mxu0
        %v2245 = vadd.f32 %v2231, %v2244
        %v2246 = vpop.f32.mrf.mxu0
        %v2247 = vadd.f32 %v2233, %v2246
        %2248 = vdwg.mxu0
        %2249 = vmatpush.bf16.msra.mxu0 %v2174
        %2250 = vmatpush.bf16.msra.mxu0 %v2173
        %2251 = vmatpush.bf16.msra.mxu0 %v2172
        %2252 = vmatpush.bf16.msra.mxu0 %v2171
        %2253 = vmatpush.bf16.msra.mxu0 %v2170
        %2254 = vmatpush.bf16.msra.mxu0 %v2169
        %2255 = vmatpush.bf16.msra.mxu0 %v2168
        %2256 = vmatpush.bf16.msra.mxu0 %v2167
        %2257 = vmatmul.bf16.gmra.mxu0 %v1950
        %v2258 = vpop.f32.mrf.mxu0
        %v2259 = vadd.f32 %v2245, %v2258
        %v2260 = vpop.f32.mrf.mxu0
        %v2261 = vadd.f32 %v2247, %v2260
        %2262 = vdwg.mxu0
        %v2263 = vadd.f32 %v1523, %v2259
        %v2264 = vadd.f32 %v1524, %v2261
        %v2265 = vld [vmem:[%s718] sm:$0x1]
        %v2267 = vperm.slane %v2265, 0
        %v2269 = vadd.f32 %v2263, %v2267
        %v2270 = vadd.f32 %v2264, %v2267
        %2271 = vst [vmem:[%s723] sm:$0xff] %v2269
        %2272 = vst [vmem:[%s723 + $0x8] sm:$0xff] %v2270
        %p2273 = scmp.lt.s32.totalorder %s36, 1
        %s2274 = scalar_select %p2273, %s36, 1
        %s2275 = smul.addr %s2274, 2
        %s2276 = smul.addr %s2275, 8
        %s2277 = scalar_lea.vmem %s14, %s2276
        // Predicated region
        $region97: #{mlp_mixer_forward.1} parent=75 // pred_check
          %p2278 = pneg %p411
        $region98: #{mlp_mixer_forward.1} parent=75 // pred_check_branch
          %2280 = sbr.rel (%p2278) target = $region100
        $region99: #{mlp_mixer_forward.1} parent=75 // pred_region
          _
        $region100: #{mlp_mixer_forward.1} parent=75 // pred_fallthru
          _
      $region76: #{mlp_mixer_forward.1} parent=5 // pred_fallthru
        _
      %p2281 = scmp.le.s32.totalorder 2, %s27
      // Predicated region
      $region101: #{mlp_mixer_forward.1} parent=5 // pred_check
        %p2282 = pneg %p2281
      $region102: #{mlp_mixer_forward.1} parent=5 // pred_check_branch
        %2284 = sbr.rel (%p2282) target = $region104
      $region103: #{mlp_mixer_forward.1} parent=5 // pred_region
        %s2285 = ssub.s32 %s27, 2
        // Predicated region
        $region105: #{mlp_mixer_forward.1} parent=103 // pred_check
          %p2286 = pneg %p417
        $region106: #{mlp_mixer_forward.1} parent=103 // pred_check_branch
          %2288 = sbr.rel (%p2286) target = $region108
        $region107: #{mlp_mixer_forward.1} parent=103 // pred_region
          %p2289 = scmp.lt.s32.totalorder %s38, 1
          %s2290 = scalar_select %p2289, %s38, 1
          %s2291 = smul.addr %s2290, 2
          %s2292 = smul.addr %s2291, 8
          %s2293 = scalar_lea.vmem %s14, %s2292
        $region108: #{mlp_mixer_forward.1} parent=103 // pred_fallthru
          _
      $region104: #{mlp_mixer_forward.1} parent=5 // pred_fallthru
        _
    $region6: #{mlp_mixer_forward.1} parent=1 // loop_footer
      %s31 = sadd.s32 1, %s27
    $region7: #{mlp_mixer_forward.1} parent=1 // loop_footer_branch
      %26 = sbr.rel target = $region3
    $region8: #{mlp_mixer_forward.1} parent=1 // loop_exit
      _
    %2294 = vsyncpa [#allocation3], 1
    %s2295 = scalar_lea.sflag [#allocation3], 1
    %2296 = vsyncpa %s2295, 1
    %2297 = vsyncpa [#allocation5], 1
    %s2298 = scalar_lea.sflag [#allocation5], 1
    %2299 = vsyncpa %s2298, 1
    %2300 = vsyncpa [#allocation8], 1
    %s2301 = scalar_lea.sflag [#allocation8], 1
    %2302 = vsyncpa %s2301, 1

</llo_original>
